<compile_context>
chip_gen: v5e
topology: v5e:2x2
jax: 0.10.0
libtpu: 0.0.40
codegen_flags: <defaults>
</compile_context>

<pallas_src>
import math
import functools

import jax
import jax.numpy as jnp
from jax.experimental import pallas as pl
from jax.experimental.pallas import tpu as pltpu

EPS = 1e-12


# ---------------------------------------------------------------------------
# generation-aware VMEM budget / tile targets
# ---------------------------------------------------------------------------
def _vmem_capacity_bytes():
    try:
        return int(pltpu.get_tpu_info().vmem_capacity_bytes)
    except Exception:
        return 128 * 1024 * 1024          # v5e/v6e default


_VMEM_CAP = _vmem_capacity_bytes()
_SMALL_VMEM = _VMEM_CAP <= 96 * 1024 * 1024          # v7x: 64 MiB per TensorCore
VMEM_LIMIT_BYTES = (32 if _SMALL_VMEM else 48) * 1024 * 1024

_TM_LINEAR = 512
_TN_LINEAR = 512
_TK_LINEAR = 256 if _SMALL_VMEM else 512
_TM_FFN = 256 if _SMALL_VMEM else 512
_TI_FFN = 256 if _SMALL_VMEM else 512
_TQ_ATTN = 256
_TK_ATTN = 512 if _SMALL_VMEM else 1024
_TS_PROJ = 256


# ---------------------------------------------------------------------------
# helpers traced into the Pallas kernel bodies
# ---------------------------------------------------------------------------
def _layer_norm(x, gamma, beta):
    mean = jnp.mean(x, axis=-1, keepdims=True)
    var = jnp.mean((x - mean) ** 2, axis=-1, keepdims=True)
    return (x - mean) * jax.lax.rsqrt(var + EPS) * gamma + beta


def _gelu_new(x):
    # tanh approximation of GELU (HF "gelu_new")
    return 0.5 * x * (1.0 + jnp.tanh(0.7978845608028654 * (x + 0.044715 * x * x * x)))


def _bf16_dot(x, w):
    # bf16 MXU operands, f32 accumulation (used by the pure-JAX reference)
    return jnp.dot(x.astype(jnp.bfloat16), w.astype(jnp.bfloat16),
                   preferred_element_type=jnp.float32)


def _pick_tile(n, target, align):
    """Largest divisor of n that is <= target and a multiple of `align`.
    Falls back to the full dimension, but refuses a silent VMEM blow-up."""
    if n <= target:
        return n
    for t in range(target, align - 1, -1):
        if n % t == 0 and t % align == 0:
            return t
    if n > 4 * target:
        raise ValueError(
            f"_pick_tile: dim {n} has no {align}-aligned divisor <= {target}; "
            "the full-dim fallback would exceed the VMEM budget - pad the input "
            "or choose different tile targets.")
    return n


# ---------------------------------------------------------------------------
# Kernel 1: tiled linear  y = x @ W + b      (bf16 in/out, f32 accumulate)
#   grid = (M-tiles, N-tiles, K-tiles), K last + "arbitrary".
# ---------------------------------------------------------------------------
def _linear_kernel(x_ref, w_ref, b_ref, o_ref, acc_ref):
    k = pl.program_id(2)
    part = jnp.dot(x_ref[...], w_ref[...], preferred_element_type=jnp.float32)

    @pl.when(k == 0)
    def _():
        acc_ref[...] = part

    @pl.when(k > 0)
    def _():
        acc_ref[...] += part

    @pl.when(k == pl.num_programs(2) - 1)
    def _():
        o_ref[...] = (acc_ref[...] + b_ref[...]).astype(o_ref.dtype)


def linear(x, w, b):
    """x: (M, K) bf16, w: (K, N) bf16, b: (1, N) f32 -> (M, N) bf16."""
    M, K = x.shape
    N = w.shape[1]
    TM = _pick_tile(M, _TM_LINEAR, 8)
    TN = _pick_tile(N, _TN_LINEAR, 128)
    TK = _pick_tile(K, _TK_LINEAR, 128)
    return pl.pallas_call(
        _linear_kernel,
        out_shape=jax.ShapeDtypeStruct((M, N), jnp.bfloat16),
        grid=(M // TM, N // TN, K // TK),
        in_specs=[
            pl.BlockSpec((TM, TK), lambda i, j, k: (i, k)),
            pl.BlockSpec((TK, TN), lambda i, j, k: (k, j)),
            pl.BlockSpec((1, TN), lambda i, j, k: (0, j)),
        ],
        out_specs=pl.BlockSpec((TM, TN), lambda i, j, k: (i, j)),
        scratch_shapes=[pltpu.VMEM((TM, TN), jnp.float32)],
        compiler_params=pltpu.CompilerParams(
            dimension_semantics=("parallel", "parallel", "arbitrary"),
            vmem_limit_bytes=VMEM_LIMIT_BYTES,
        ),
    )(x, w, b)


# ---------------------------------------------------------------------------
# Kernel 2: flash-style attention, all heads batched per grid step.
#   q,k,v: (B, nh, S, hd) bf16 (scale pre-folded into wq) -> ctx (B, nh, S, hd) bf16
#   grid = (B, q-tiles, k-tiles); running stats are 2-D (nh, TQ) to avoid lane padding.
# ---------------------------------------------------------------------------
def _attention_kernel(q_ref, k_ref, v_ref, o_ref, m_sc, l_sc, acc_sc):
    ki = pl.program_id(2)

    @pl.when(ki == 0)
    def _():
        m_sc[...] = jnp.full_like(m_sc, -jnp.inf)
        l_sc[...] = jnp.zeros_like(l_sc)
        acc_sc[...] = jnp.zeros_like(acc_sc)

    q = q_ref[0]            # (nh, TQ, hd) bf16, already scaled via wq
    k = k_ref[0]            # (nh, TK, hd) bf16
    v = v_ref[0]            # (nh, TK, hd) bf16

    # scores: (nh, TQ, TK) - head axis batched on the MXU, no explicit transpose.
    s = jnp.einsum("nqd,nkd->nqk", q, k, preferred_element_type=jnp.float32)

    m_prev = m_sc[...]                                   # (nh, TQ)
    m_new = jnp.maximum(m_prev, jnp.max(s, axis=-1))     # (nh, TQ)
    alpha = jnp.exp(m_prev - m_new)                      # (nh, TQ)
    p = jnp.exp(s - m_new[..., None])                    # (nh, TQ, TK)
    l_sc[...] = alpha * l_sc[...] + jnp.sum(p, axis=-1)
    acc_sc[...] = alpha[..., None] * acc_sc[...] + jnp.einsum(
        "nqk,nkd->nqd", p.astype(jnp.bfloat16), v,
        preferred_element_type=jnp.float32)
    m_sc[...] = m_new

    @pl.when(ki == pl.num_programs(2) - 1)
    def _():
        inv = pl.reciprocal(l_sc[...], approx=True)      # EUP slot, off the VALU path
        o_ref[0] = (acc_sc[...] * inv[..., None]).astype(o_ref.dtype)


def attention(q, k, v):
    B, nh, S, hd = q.shape
    TQ = _pick_tile(S, _TQ_ATTN, 8)
    TK = _pick_tile(S, _TK_ATTN, 8)
    return pl.pallas_call(
        _attention_kernel,
        out_shape=jax.ShapeDtypeStruct((B, nh, S, hd), jnp.bfloat16),
        grid=(B, S // TQ, S // TK),
        in_specs=[
            pl.BlockSpec((1, nh, TQ, hd), lambda b, qi, ki: (b, 0, qi, 0)),
            pl.BlockSpec((1, nh, TK, hd), lambda b, qi, ki: (b, 0, ki, 0)),
            pl.BlockSpec((1, nh, TK, hd), lambda b, qi, ki: (b, 0, ki, 0)),
        ],
        out_specs=pl.BlockSpec((1, nh, TQ, hd), lambda b, qi, ki: (b, 0, qi, 0)),
        scratch_shapes=[
            pltpu.VMEM((nh, TQ), jnp.float32),       # running max
            pltpu.VMEM((nh, TQ), jnp.float32),       # running sum
            pltpu.VMEM((nh, TQ, hd), jnp.float32),   # context accumulator
        ],
        compiler_params=pltpu.CompilerParams(
            dimension_semantics=("parallel", "parallel", "arbitrary"),
            vmem_limit_bytes=VMEM_LIMIT_BYTES,
        ),
    )(q, k, v)


# ---------------------------------------------------------------------------
# Kernel 3: attention output projection + residual + LayerNorm, with the
#   head-merge folded into the K-reduction (reduce over heads).
#   ctx: (B, nh, S, hd) bf16, w: (nh, hd, H) bf16, residual: (B, S, H) bf16
#   grid = (B, S-tiles, nh)  -> out (B, S, H) bf16, lane-dense stores (H wide).
# ---------------------------------------------------------------------------
def _proj_res_ln_kernel(x_ref, w_ref, b_ref, r_ref, g_ref, beta_ref, o_ref, acc_ref):
    h = pl.program_id(2)
    part = jnp.dot(x_ref[...], w_ref[...], preferred_element_type=jnp.float32)

    @pl.when(h == 0)
    def _():
        acc_ref[...] = part

    @pl.when(h > 0)
    def _():
        acc_ref[...] += part

    @pl.when(h == pl.num_programs(2) - 1)
    def _():
        y = acc_ref[...] + b_ref[...] + r_ref[...].astype(jnp.float32)
        o_ref[...] = _layer_norm(y, g_ref[...], beta_ref[...]).astype(o_ref.dtype)


def attn_out_projection(ctx, w3, b, residual, gamma, beta):
    """LN(merge_heads(ctx) @ Wd + b + residual); no explicit head-merge transpose."""
    B, nh, S, hd = ctx.shape
    H = nh * hd
    TS = _pick_tile(S, _TS_PROJ, 8)
    return pl.pallas_call(
        _proj_res_ln_kernel,
        out_shape=jax.ShapeDtypeStruct((B, S, H), jnp.bfloat16),
        grid=(B, S // TS, nh),
        in_specs=[
            pl.BlockSpec((None, None, TS, hd), lambda b, i, h: (b, h, i, 0)),
            pl.BlockSpec((None, hd, H), lambda b, i, h: (h, 0, 0)),
            pl.BlockSpec((1, H), lambda b, i, h: (0, 0)),
            pl.BlockSpec((None, TS, H), lambda b, i, h: (b, i, 0)),
            pl.BlockSpec((1, H), lambda b, i, h: (0, 0)),
            pl.BlockSpec((1, H), lambda b, i, h: (0, 0)),
        ],
        out_specs=pl.BlockSpec((None, TS, H), lambda b, i, h: (b, i, 0)),
        scratch_shapes=[pltpu.VMEM((TS, H), jnp.float32)],
        compiler_params=pltpu.CompilerParams(
            dimension_semantics=("parallel", "parallel", "arbitrary"),
            vmem_limit_bytes=VMEM_LIMIT_BYTES,
        ),
    )(ctx, w3, b, residual, gamma, beta)


# ---------------------------------------------------------------------------
# Kernel 4: fused FFN   LN( gelu(x @ W1 + b1) @ W2 + b2 + x )
#   grid = (M-tiles, I-tiles); the (M, I) intermediate never touches HBM.
#   x doubles as the residual (it is resident across the I reduction).
# ---------------------------------------------------------------------------
def _ffn_kernel(x_ref, w1_ref, b1_ref, w2_ref, b2_ref, g_ref, beta_ref, o_ref, acc_ref):
    j = pl.program_id(1)
    x = x_ref[...]                                            # (TM, H) bf16, resident
    g = jnp.dot(x, w1_ref[...], preferred_element_type=jnp.float32) + b1_ref[...]
    g = _gelu_new(g)
    part = jnp.dot(g.astype(jnp.bfloat16), w2_ref[...],
                   preferred_element_type=jnp.float32)

    @pl.when(j == 0)
    def _():
        acc_ref[...] = part

    @pl.when(j > 0)
    def _():
        acc_ref[...] += part

    @pl.when(j == pl.num_programs(1) - 1)
    def _():
        y = acc_ref[...] + b2_ref[...] + x.astype(jnp.float32)
        o_ref[...] = _layer_norm(y, g_ref[...], beta_ref[...]).astype(o_ref.dtype)


def ffn_residual_layernorm(x, w1, b1, w2, b2, gamma, beta):
    """x: (M, H) bf16 (also the residual), w1: (H, I), w2: (I, H) bf16 -> (M, H) bf16."""
    M, H = x.shape
    I = w1.shape[1]
    TM = _pick_tile(M, _TM_FFN, 8)
    TI = _pick_tile(I, _TI_FFN, 128)
    return pl.pallas_call(
        _ffn_kernel,
        out_shape=jax.ShapeDtypeStruct((M, H), jnp.bfloat16),
        grid=(M // TM, I // TI),
        in_specs=[
            pl.BlockSpec((TM, H), lambda i, j: (i, 0)),
            pl.BlockSpec((H, TI), lambda i, j: (0, j)),
            pl.BlockSpec((1, TI), lambda i, j: (0, j)),
            pl.BlockSpec((TI, H), lambda i, j: (j, 0)),
            pl.BlockSpec((1, H), lambda i, j: (0, 0)),
            pl.BlockSpec((1, H), lambda i, j: (0, 0)),
            pl.BlockSpec((1, H), lambda i, j: (0, 0)),
        ],
        out_specs=pl.BlockSpec((TM, H), lambda i, j: (i, 0)),
        scratch_shapes=[pltpu.VMEM((TM, H), jnp.float32)],
        compiler_params=pltpu.CompilerParams(
            dimension_semantics=("parallel", "arbitrary"),
            vmem_limit_bytes=VMEM_LIMIT_BYTES,
        ),
    )(x, w1, b1, w2, b2, gamma, beta)


# ---------------------------------------------------------------------------
# Parameter init (deterministic, synthetic).  Kernel-side weights are bf16,
# pre-transposed to [in, out]; the fused QKV weight/bias carry the 1/sqrt(hd)
# scale folded into the q columns.  Biases / LN params stay f32.
# ---------------------------------------------------------------------------
def _linear_init(key, fan_in, fan_out):
    w = jax.random.normal(key, (fan_in, fan_out), jnp.float32) * 0.02
    b = jnp.zeros((1, fan_out), jnp.float32)
    return w, b


def init_params(key, cfg):
    E, H, I = cfg["embedding_size"], cfg["hidden_size"], cfg["intermediate_size"]
    G = cfg["num_hidden_groups"]
    nh = cfg["num_attention_heads"]
    hd = H // nh
    scale = 1.0 / math.sqrt(hd)
    layers_per_group = cfg["num_hidden_layers"] // G

    keys = iter(jax.random.split(key, 1 + G * (4 + 2 * layers_per_group)))
    params = {}
    emb_w, emb_b = _linear_init(next(keys), E, H)
    params["emb_w"] = emb_w.astype(jnp.bfloat16)
    params["emb_b"] = emb_b

    groups = []
    for _ in range(G):
        wq, bq = _linear_init(next(keys), H, H)
        wk, bk = _linear_init(next(keys), H, H)
        wv, bv = _linear_init(next(keys), H, H)
        wd, bd = _linear_init(next(keys), H, H)
        attn = dict(
            # reference copies (bf16 values identical to what the kernels consume)
            wq=wq.astype(jnp.bfloat16), bq=bq,
            wk=wk.astype(jnp.bfloat16), bk=bk,
            wv=wv.astype(jnp.bfloat16), bv=bv,
            wd=wd.astype(jnp.bfloat16), bd=bd,
            # kernel-side fused QKV with 1/sqrt(hd) folded into the q columns
            wqkv=jnp.concatenate([wq * scale, wk, wv], axis=1).astype(jnp.bfloat16),
            bqkv=jnp.concatenate([bq * scale, bk, bv], axis=1),
            # output projection viewed as (nh, hd, H) so the head-merge becomes
            # the K reduction of the projection kernel
            wd3=wd.reshape(nh, hd, H).astype(jnp.bfloat16),
            ln_g=jnp.ones((1, H), jnp.float32),
            ln_b=jnp.zeros((1, H), jnp.float32))
        ffns = []
        for _ in range(layers_per_group):
            w1, b1 = _linear_init(next(keys), H, I)
            w2, b2 = _linear_init(next(keys), I, H)
            ffns.append(dict(w1=w1.astype(jnp.bfloat16), b1=b1,
                             w2=w2.astype(jnp.bfloat16), b2=b2,
                             ln_g=jnp.ones((1, H), jnp.float32),
                             ln_b=jnp.zeros((1, H), jnp.float32)))
        groups.append(dict(attn=attn, ffns=ffns))
    params["groups"] = groups
    return params


# ---------------------------------------------------------------------------
# Full TESSTransformer forward (Pallas kernels for all heavy compute).
# ---------------------------------------------------------------------------
def tess_transformer_forward(params, hidden_states, cfg):
    nh = cfg["num_attention_heads"]
    H = cfg["hidden_size"]
    assert H % nh == 0, "hidden_size must be a multiple of num_attention_heads"
    hd = H // nh
    B, S, E = hidden_states.shape
    M = B * S

    x2d = hidden_states.reshape(M, E).astype(jnp.bfloat16)
    h2d = linear(x2d, params["emb_w"], params["emb_b"])            # (M, H) bf16

    for group in params["groups"]:
        a = group["attn"]
        for f in group["ffns"]:
            # fused QKV projection: reads activations once, writes (M, 3H) bf16
            qkv = linear(h2d, a["wqkv"], a["bqkv"])                # (M, 3H) bf16
            # TODO(synk): this head-split transpose is the one remaining wrapper-side
            #             layout copy (bf16, so half the old cost).
            qkv = qkv.reshape(B, S, 3, nh, hd).transpose(2, 0, 3, 1, 4)  # (3,B,nh,S,hd)
            ctx = attention(qkv[0], qkv[1], qkv[2])                # (B, nh, S, hd) bf16

            # output projection (head-merge folded into reduction) + residual + LN
            attn_out = attn_out_projection(
                ctx, a["wd3"], a["bd"], h2d.reshape(B, S, H),
                a["ln_g"], a["ln_b"]).reshape(M, H)                # (M, H) bf16

            # fused FFN: gelu(x@W1+b1)@W2+b2, residual + LayerNorm, no (M,I) in HBM
            h2d = ffn_residual_layernorm(
                attn_out, f["w1"], f["b1"], f["w2"], f["b2"],
                f["ln_g"], f["ln_b"])                              # (M, H) bf16

    return h2d.reshape(B, S, H).astype(jnp.float32)   # last_hidden_state


# ---------------------------------------------------------------------------
# Pure-JAX reference (mirrors the kernels' bf16 storage / f32 accumulation,
# exact softmax + score-side 1/sqrt(hd) as in the PyTorch module)
# ---------------------------------------------------------------------------
def _ref_forward(params, x, cfg):
    nh = cfg["num_attention_heads"]
    H = cfg["hidden_size"]
    hd = H // nh
    h = (_bf16_dot(x, params["emb_w"]) + params["emb_b"]).astype(jnp.bfloat16)
    for group in params["groups"]:
        a = group["attn"]
        for f in group["ffns"]:
            q = (_bf16_dot(h, a["wq"]) + a["bq"]).astype(jnp.bfloat16)
            k = (_bf16_dot(h, a["wk"]) + a["bk"]).astype(jnp.bfloat16)
            v = (_bf16_dot(h, a["wv"]) + a["bv"]).astype(jnp.bfloat16)
            B, S, _ = q.shape
            qh = q.reshape(B, S, nh, hd).transpose(0, 2, 1, 3)
            kh = k.reshape(B, S, nh, hd).transpose(0, 2, 1, 3)
            vh = v.reshape(B, S, nh, hd).transpose(0, 2, 1, 3)
            sc = jnp.einsum("bhqd,bhkd->bhqk", qh, kh,
                            preferred_element_type=jnp.float32) / math.sqrt(hd)
            p = jax.nn.softmax(sc, axis=-1)
            ctx = jnp.einsum("bhqk,bhkd->bhqd", p.astype(jnp.bfloat16), vh,
                             preferred_element_type=jnp.float32)
            ctx = ctx.transpose(0, 2, 1, 3).reshape(B, S, H).astype(jnp.bfloat16)
            proj = _bf16_dot(ctx, a["wd"]) + a["bd"]
            attn_out = _layer_norm(h.astype(jnp.float32) + proj,
                                   a["ln_g"], a["ln_b"]).astype(jnp.bfloat16)
            g = _gelu_new(_bf16_dot(attn_out, f["w1"]) + f["b1"])
            ff = _bf16_dot(g, f["w2"]) + f["b2"]
            h = _layer_norm(ff + attn_out.astype(jnp.float32),
                            f["ln_g"], f["ln_b"]).astype(jnp.bfloat16)
    return h.astype(jnp.float32)


# ---------------------------------------------------------------------------
if __name__ == "__main__":
    cfg = dict(
        embedding_size=16,
        hidden_size=32,
        num_attention_heads=4,
        intermediate_size=64,
        num_hidden_layers=2,
        num_hidden_groups=1,
        layer_norm_eps=EPS,
        hidden_act="gelu_new",
    )

    key = jax.random.PRNGKey(0)
    k_param, k_in = jax.random.split(key)
    params = init_params(k_param, cfg)

    B, S = 2, 8
    x = jax.random.normal(k_in, (B, S, cfg["embedding_size"]), jnp.float32)

    fwd = jax.jit(functools.partial(tess_transformer_forward, cfg=cfg))
    out = fwd(params, x)
    out = jax.block_until_ready(out)

    ref = _ref_forward(params, x, cfg)
    assert out.shape == (B, S, cfg["hidden_size"])
    max_err = float(jnp.max(jnp.abs(out - ref)))
    assert jnp.allclose(out, ref, atol=2e-2, rtol=2e-2), \
        f"mismatch vs JAX reference (max abs err {max_err})"

    print("KERNEL_OK")
</pallas_src>

<mosaic_0001>
module attributes {stable_mosaic.version = 11 : i64} {
  func.func @_linear_kernel(%arg0: i32, %arg1: i32, %arg2: i32, %arg3: memref<16x32xbf16, #tpu.memory_space<vmem>>, %arg4: memref<32x96xbf16, #tpu.memory_space<vmem>>, %arg5: memref<1x96xf32, #tpu.memory_space<vmem>>, %arg6: memref<16x96xbf16, #tpu.memory_space<vmem>>, %arg7: memref<16x96xf32, #tpu.memory_space<vmem>>) attributes {dimension_semantics = [#tpu.dimension_semantics<parallel>, #tpu.dimension_semantics<parallel>, #tpu.dimension_semantics<arbitrary>], iteration_bounds = array<i64: 1, 1, 1>, scalar_prefetch = 0 : i64, scratch_operands = 1 : i64, tpu.core_type = #tpu.core_type<tc>, window_params = [{transform_indices = @transform_0, window_bounds = array<i64: 16, 32>}, {transform_indices = @transform_1, window_bounds = array<i64: 32, 96>}, {transform_indices = @transform_2, window_bounds = array<i64: 1, 96>}, {transform_indices = @transform_3, window_bounds = array<i64: 16, 96>}]} {
    %c0 = arith.constant 0 : index
    %c0_0 = arith.constant 0 : index
    %0 = vector.load %arg3[%c0, %c0_0] : memref<16x32xbf16, #tpu.memory_space<vmem>>, vector<16x32xbf16>
    %c0_1 = arith.constant 0 : index
    %c0_2 = arith.constant 0 : index
    %1 = vector.load %arg4[%c0_1, %c0_2] : memref<32x96xbf16, #tpu.memory_space<vmem>>, vector<32x96xbf16>
    %cst = arith.constant dense<0.000000e+00> : vector<16x96xf32>
    %2 = tpu.matmul %0, %1, %cst {dimension_numbers = #tpu.dot_dimension_numbers<[1], [0], [0], [1], [0, 0, 1, 1], [], []>} : vector<16x32xbf16>, vector<32x96xbf16>, vector<16x96xf32> -> vector<16x96xf32>
    %c0_i32 = arith.constant 0 : i32
    %3 = arith.cmpi eq, %arg2, %c0_i32 : i32
    %4 = arith.extui %3 : i1 to i32
    %c0_i32_3 = arith.constant 0 : i32
    %5 = arith.cmpi ne, %4, %c0_i32_3 : i32
    scf.if %5 {
      %c0_8 = arith.constant 0 : index
      %c0_9 = arith.constant 0 : index
      %12 = vector.load %arg7[%c0_8, %c0_9] : memref<16x96xf32, #tpu.memory_space<vmem>>, vector<16x96xf32>
      tpu.vector_store %arg7[%c0_8, %c0_9], %2 {strides = array<i32>} : memref<16x96xf32, #tpu.memory_space<vmem>>, vector<16x96xf32>,
    } else {
    }
    %c0_i32_4 = arith.constant 0 : i32
    %6 = arith.cmpi sgt, %arg2, %c0_i32_4 : i32
    %7 = arith.extui %6 : i1 to i32
    %c0_i32_5 = arith.constant 0 : i32
    %8 = arith.cmpi ne, %7, %c0_i32_5 : i32
    scf.if %8 {
      %c0_8 = arith.constant 0 : index
      %c0_9 = arith.constant 0 : index
      %12 = vector.load %arg7[%c0_8, %c0_9] : memref<16x96xf32, #tpu.memory_space<vmem>>, vector<16x96xf32>
      %13 = arith.addf %12, %2 : vector<16x96xf32>
      %c0_10 = arith.constant 0 : index
      %c0_11 = arith.constant 0 : index
      %14 = vector.load %arg7[%c0_10, %c0_11] : memref<16x96xf32, #tpu.memory_space<vmem>>, vector<16x96xf32>
      tpu.vector_store %arg7[%c0_10, %c0_11], %13 {strides = array<i32>} : memref<16x96xf32, #tpu.memory_space<vmem>>, vector<16x96xf32>,
    } else {
    }
    %c0_i32_6 = arith.constant 0 : i32
    %9 = arith.cmpi eq, %arg2, %c0_i32_6 : i32
    %10 = arith.extui %9 : i1 to i32
    %c0_i32_7 = arith.constant 0 : i32
    %11 = arith.cmpi ne, %10, %c0_i32_7 : i32
    scf.if %11 {
      %c0_8 = arith.constant 0 : index
      %c0_9 = arith.constant 0 : index
      %12 = vector.load %arg7[%c0_8, %c0_9] : memref<16x96xf32, #tpu.memory_space<vmem>>, vector<16x96xf32>
      %c0_10 = arith.constant 0 : index
      %c0_11 = arith.constant 0 : index
      %13 = vector.load %arg5[%c0_10, %c0_11] : memref<1x96xf32, #tpu.memory_space<vmem>>, vector<1x96xf32>
      %14 = vector.broadcast %13 : vector<1x96xf32> to vector<16x96xf32>
      %15 = arith.addf %12, %14 : vector<16x96xf32>
      %16 = arith.truncf %15 : vector<16x96xf32> to vector<16x96xbf16>
      %c0_12 = arith.constant 0 : index
      %c0_13 = arith.constant 0 : index
      %17 = vector.load %arg6[%c0_12, %c0_13] : memref<16x96xbf16, #tpu.memory_space<vmem>>, vector<16x96xbf16>
      tpu.vector_store %arg6[%c0_12, %c0_13], %16 {strides = array<i32>} : memref<16x96xbf16, #tpu.memory_space<vmem>>, vector<16x96xbf16>,
    } else {
    }
    return
  }
  func.func @transform_0(%arg0: i32, %arg1: i32, %arg2: i32) -> (i32, i32) {
    %c0_i32 = arith.constant 0 : i32
    return %arg0, %arg2 : i32, i32
  }
  func.func @transform_1(%arg0: i32, %arg1: i32, %arg2: i32) -> (i32, i32) {
    %c0_i32 = arith.constant 0 : i32
    return %arg2, %arg1 : i32, i32
  }
  func.func @transform_2(%arg0: i32, %arg1: i32, %arg2: i32) -> (i32, i32) {
    %c0_i32 = arith.constant 0 : i32
    %c0_i32_0 = arith.constant 0 : i32
    return %c0_i32, %arg1 : i32, i32
  }
  func.func @transform_3(%arg0: i32, %arg1: i32, %arg2: i32) -> (i32, i32) {
    %c0_i32 = arith.constant 0 : i32
    return %arg0, %arg1 : i32, i32
  }
}

module attributes {stable_mosaic.version = 11 : i64} {
  func.func @_linear_kernel(%arg0: i32, %arg1: i32, %arg2: i32, %arg3: memref<16x16xbf16, #tpu.memory_space<vmem>>, %arg4: memref<16x32xbf16, #tpu.memory_space<vmem>>, %arg5: memref<1x32xf32, #tpu.memory_space<vmem>>, %arg6: memref<16x32xbf16, #tpu.memory_space<vmem>>, %arg7: memref<16x32xf32, #tpu.memory_space<vmem>>) attributes {dimension_semantics = [#tpu.dimension_semantics<parallel>, #tpu.dimension_semantics<parallel>, #tpu.dimension_semantics<arbitrary>], iteration_bounds = array<i64: 1, 1, 1>, scalar_prefetch = 0 : i64, scratch_operands = 1 : i64, tpu.core_type = #tpu.core_type<tc>, window_params = [{transform_indices = @transform_0, window_bounds = array<i64: 16, 16>}, {transform_indices = @transform_1, window_bounds = array<i64: 16, 32>}, {transform_indices = @transform_2, window_bounds = array<i64: 1, 32>}, {transform_indices = @transform_3, window_bounds = array<i64: 16, 32>}]} {
    %c0 = arith.constant 0 : index
    %c0_0 = arith.constant 0 : index
    %0 = vector.load %arg3[%c0, %c0_0] : memref<16x16xbf16, #tpu.memory_space<vmem>>, vector<16x16xbf16>
    %c0_1 = arith.constant 0 : index
    %c0_2 = arith.constant 0 : index
    %1 = vector.load %arg4[%c0_1, %c0_2] : memref<16x32xbf16, #tpu.memory_space<vmem>>, vector<16x32xbf16>
    %cst = arith.constant dense<0.000000e+00> : vector<16x32xf32>
    %2 = tpu.matmul %0, %1, %cst {dimension_numbers = #tpu.dot_dimension_numbers<[1], [0], [0], [1], [0, 0, 1, 1], [], []>} : vector<16x16xbf16>, vector<16x32xbf16>, vector<16x32xf32> -> vector<16x32xf32>
    %c0_i32 = arith.constant 0 : i32
    %3 = arith.cmpi eq, %arg2, %c0_i32 : i32
    %4 = arith.extui %3 : i1 to i32
    %c0_i32_3 = arith.constant 0 : i32
    %5 = arith.cmpi ne, %4, %c0_i32_3 : i32
    scf.if %5 {
      %c0_8 = arith.constant 0 : index
      %c0_9 = arith.constant 0 : index
      %12 = vector.load %arg7[%c0_8, %c0_9] : memref<16x32xf32, #tpu.memory_space<vmem>>, vector<16x32xf32>
      tpu.vector_store %arg7[%c0_8, %c0_9], %2 {strides = array<i32>} : memref<16x32xf32, #tpu.memory_space<vmem>>, vector<16x32xf32>,
    } else {
    }
    %c0_i32_4 = arith.constant 0 : i32
    %6 = arith.cmpi sgt, %arg2, %c0_i32_4 : i32
    %7 = arith.extui %6 : i1 to i32
    %c0_i32_5 = arith.constant 0 : i32
    %8 = arith.cmpi ne, %7, %c0_i32_5 : i32
    scf.if %8 {
      %c0_8 = arith.constant 0 : index
      %c0_9 = arith.constant 0 : index
      %12 = vector.load %arg7[%c0_8, %c0_9] : memref<16x32xf32, #tpu.memory_space<vmem>>, vector<16x32xf32>
      %13 = arith.addf %12, %2 : vector<16x32xf32>
      %c0_10 = arith.constant 0 : index
      %c0_11 = arith.constant 0 : index
      %14 = vector.load %arg7[%c0_10, %c0_11] : memref<16x32xf32, #tpu.memory_space<vmem>>, vector<16x32xf32>
      tpu.vector_store %arg7[%c0_10, %c0_11], %13 {strides = array<i32>} : memref<16x32xf32, #tpu.memory_space<vmem>>, vector<16x32xf32>,
    } else {
    }
    %c0_i32_6 = arith.constant 0 : i32
    %9 = arith.cmpi eq, %arg2, %c0_i32_6 : i32
    %10 = arith.extui %9 : i1 to i32
    %c0_i32_7 = arith.constant 0 : i32
    %11 = arith.cmpi ne, %10, %c0_i32_7 : i32
    scf.if %11 {
      %c0_8 = arith.constant 0 : index
      %c0_9 = arith.constant 0 : index
      %12 = vector.load %arg7[%c0_8, %c0_9] : memref<16x32xf32, #tpu.memory_space<vmem>>, vector<16x32xf32>
      %c0_10 = arith.constant 0 : index
      %c0_11 = arith.constant 0 : index
      %13 = vector.load %arg5[%c0_10, %c0_11] : memref<1x32xf32, #tpu.memory_space<vmem>>, vector<1x32xf32>
      %14 = vector.broadcast %13 : vector<1x32xf32> to vector<16x32xf32>
      %15 = arith.addf %12, %14 : vector<16x32xf32>
      %16 = arith.truncf %15 : vector<16x32xf32> to vector<16x32xbf16>
      %c0_12 = arith.constant 0 : index
      %c0_13 = arith.constant 0 : index
      %17 = vector.load %arg6[%c0_12, %c0_13] : memref<16x32xbf16, #tpu.memory_space<vmem>>, vector<16x32xbf16>
      tpu.vector_store %arg6[%c0_12, %c0_13], %16 {strides = array<i32>} : memref<16x32xbf16, #tpu.memory_space<vmem>>, vector<16x32xbf16>,
    } else {
    }
    return
  }
  func.func @transform_0(%arg0: i32, %arg1: i32, %arg2: i32) -> (i32, i32) {
    %c0_i32 = arith.constant 0 : i32
    return %arg0, %arg2 : i32, i32
  }
  func.func @transform_1(%arg0: i32, %arg1: i32, %arg2: i32) -> (i32, i32) {
    %c0_i32 = arith.constant 0 : i32
    return %arg2, %arg1 : i32, i32
  }
  func.func @transform_2(%arg0: i32, %arg1: i32, %arg2: i32) -> (i32, i32) {
    %c0_i32 = arith.constant 0 : i32
    %c0_i32_0 = arith.constant 0 : i32
    return %c0_i32, %arg1 : i32, i32
  }
  func.func @transform_3(%arg0: i32, %arg1: i32, %arg2: i32) -> (i32, i32) {
    %c0_i32 = arith.constant 0 : i32
    return %arg0, %arg1 : i32, i32
  }
}

module attributes {stable_mosaic.version = 11 : i64} {
  func.func @_attention_kernel(%arg0: i32, %arg1: i32, %arg2: i32, %arg3: memref<1x4x8x8xbf16, #tpu.memory_space<vmem>>, %arg4: memref<1x4x8x8xbf16, #tpu.memory_space<vmem>>, %arg5: memref<1x4x8x8xbf16, #tpu.memory_space<vmem>>, %arg6: memref<1x4x8x8xbf16, #tpu.memory_space<vmem>>, %arg7: memref<4x8xf32, #tpu.memory_space<vmem>>, %arg8: memref<4x8xf32, #tpu.memory_space<vmem>>, %arg9: memref<4x8x8xf32, #tpu.memory_space<vmem>>) attributes {dimension_semantics = [#tpu.dimension_semantics<parallel>, #tpu.dimension_semantics<parallel>, #tpu.dimension_semantics<arbitrary>], iteration_bounds = array<i64: 2, 1, 1>, scalar_prefetch = 0 : i64, scratch_operands = 3 : i64, tpu.core_type = #tpu.core_type<tc>, window_params = [{transform_indices = @transform_0, window_bounds = array<i64: 1, 4, 8, 8>}, {transform_indices = @transform_1, window_bounds = array<i64: 1, 4, 8, 8>}, {transform_indices = @transform_2, window_bounds = array<i64: 1, 4, 8, 8>}, {transform_indices = @transform_3, window_bounds = array<i64: 1, 4, 8, 8>}]} {
    %c0_i32 = arith.constant 0 : i32
    %0 = arith.cmpi eq, %arg2, %c0_i32 : i32
    %1 = arith.extui %0 : i1 to i32
    %c0_i32_0 = arith.constant 0 : i32
    %2 = arith.cmpi ne, %1, %c0_i32_0 : i32
    scf.if %2 {
      %cst_31 = arith.constant 0xFF800000 : f32
      %36 = vector.broadcast %cst_31 : f32 to vector<4x8xf32>
      %c0_32 = arith.constant 0 : index
      %c0_33 = arith.constant 0 : index
      %37 = vector.load %arg7[%c0_32, %c0_33] : memref<4x8xf32, #tpu.memory_space<vmem>>, vector<4x8xf32>
      tpu.vector_store %arg7[%c0_32, %c0_33], %36 {strides = array<i32>} : memref<4x8xf32, #tpu.memory_space<vmem>>, vector<4x8xf32>,
      %cst_34 = arith.constant 0.000000e+00 : f32
      %38 = vector.broadcast %cst_34 : f32 to vector<4x8xf32>
      %c0_35 = arith.constant 0 : index
      %c0_36 = arith.constant 0 : index
      %39 = vector.load %arg8[%c0_35, %c0_36] : memref<4x8xf32, #tpu.memory_space<vmem>>, vector<4x8xf32>
      tpu.vector_store %arg8[%c0_35, %c0_36], %38 {strides = array<i32>} : memref<4x8xf32, #tpu.memory_space<vmem>>, vector<4x8xf32>,
      %cst_37 = arith.constant 0.000000e+00 : f32
      %40 = vector.broadcast %cst_37 : f32 to vector<4x8x8xf32>
      %c0_38 = arith.constant 0 : index
      %c0_39 = arith.constant 0 : index
      %c0_40 = arith.constant 0 : index
      %41 = vector.load %arg9[%c0_38, %c0_39, %c0_40] : memref<4x8x8xf32, #tpu.memory_space<vmem>>, vector<4x8x8xf32>
      tpu.vector_store %arg9[%c0_38, %c0_39, %c0_40], %40 {strides = array<i32>} : memref<4x8x8xf32, #tpu.memory_space<vmem>>, vector<4x8x8xf32>,
    } else {
    }
    %c0 = arith.constant 0 : index
    %c0_1 = arith.constant 0 : index
    %c0_2 = arith.constant 0 : index
    %c0_3 = arith.constant 0 : index
    %3 = vector.load %arg3[%c0, %c0_1, %c0_2, %c0_3] : memref<1x4x8x8xbf16, #tpu.memory_space<vmem>>, vector<1x4x8x8xbf16>
    %4 = vector.shape_cast %3 : vector<1x4x8x8xbf16> to vector<4x8x8xbf16>
    %c0_4 = arith.constant 0 : index
    %c0_5 = arith.constant 0 : index
    %c0_6 = arith.constant 0 : index
    %c0_7 = arith.constant 0 : index
    %5 = vector.load %arg4[%c0_4, %c0_5, %c0_6, %c0_7] : memref<1x4x8x8xbf16, #tpu.memory_space<vmem>>, vector<1x4x8x8xbf16>
    %6 = vector.shape_cast %5 : vector<1x4x8x8xbf16> to vector<4x8x8xbf16>
    %c0_8 = arith.constant 0 : index
    %c0_9 = arith.constant 0 : index
    %c0_10 = arith.constant 0 : index
    %c0_11 = arith.constant 0 : index
    %7 = vector.load %arg5[%c0_8, %c0_9, %c0_10, %c0_11] : memref<1x4x8x8xbf16, #tpu.memory_space<vmem>>, vector<1x4x8x8xbf16>
    %8 = vector.shape_cast %7 : vector<1x4x8x8xbf16> to vector<4x8x8xbf16>
    "tpu.trace_start"() <{level = 10 : i32, message = "nqd,nkd->nqk"}> : () -> ()
    %cst = arith.constant dense<0.000000e+00> : vector<4x8x8xf32>
    %9 = tpu.matmul %4, %6, %cst {dimension_numbers = #tpu.dot_dimension_numbers<[2], [2], [1], [1], [0, 0, 0, 1, 1, 1], [0], [0]>} : vector<4x8x8xbf16>, vector<4x8x8xbf16>, vector<4x8x8xf32> -> vector<4x8x8xf32>
    "tpu.trace_stop"() : () -> ()
    %c0_12 = arith.constant 0 : index
    %c0_13 = arith.constant 0 : index
    %10 = vector.load %arg7[%c0_12, %c0_13] : memref<4x8xf32, #tpu.memory_space<vmem>>, vector<4x8xf32>
    %cst_14 = arith.constant dense<0xFF800000> : vector<4x8xf32>
    %11 = vector.multi_reduction <maximumf>, %9, %cst_14 [2] : vector<4x8x8xf32> to vector<4x8xf32>
    %12 = arith.maximumf %10, %11 : vector<4x8xf32>
    %13 = arith.subf %10, %12 : vector<4x8xf32>
    %14 = math.exp %13 : vector<4x8xf32>
    %15 = vector.shape_cast %12 : vector<4x8xf32> to vector<4x8x1xf32>
    %16 = vector.broadcast %15 : vector<4x8x1xf32> to vector<4x8x8xf32>
    %17 = arith.subf %9, %16 : vector<4x8x8xf32>
    %18 = math.exp %17 : vector<4x8x8xf32>
    %c0_15 = arith.constant 0 : index
    %c0_16 = arith.constant 0 : index
    %19 = vector.load %arg8[%c0_15, %c0_16] : memref<4x8xf32, #tpu.memory_space<vmem>>, vector<4x8xf32>
    %20 = arith.mulf %14, %19 : vector<4x8xf32>
    %cst_17 = arith.constant dense<0.000000e+00> : vector<4x8xf32>
    %21 = vector.multi_reduction <add>, %18, %cst_17 [2] : vector<4x8x8xf32> to vector<4x8xf32>
    %22 = arith.addf %20, %21 : vector<4x8xf32>
    %c0_18 = arith.constant 0 : index
    %c0_19 = arith.constant 0 : index
    %23 = vector.load %arg8[%c0_18, %c0_19] : memref<4x8xf32, #tpu.memory_space<vmem>>, vector<4x8xf32>
    tpu.vector_store %arg8[%c0_18, %c0_19], %22 {strides = array<i32>} : memref<4x8xf32, #tpu.memory_space<vmem>>, vector<4x8xf32>,
    %24 = vector.shape_cast %14 : vector<4x8xf32> to vector<4x8x1xf32>
    %c0_20 = arith.constant 0 : index
    %c0_21 = arith.constant 0 : index
    %c0_22 = arith.constant 0 : index
    %25 = vector.load %arg9[%c0_20, %c0_21, %c0_22] : memref<4x8x8xf32, #tpu.memory_space<vmem>>, vector<4x8x8xf32>
    %26 = vector.broadcast %24 : vector<4x8x1xf32> to vector<4x8x8xf32>
    %27 = arith.mulf %26, %25 : vector<4x8x8xf32>
    %28 = arith.truncf %18 : vector<4x8x8xf32> to vector<4x8x8xbf16>
    "tpu.trace_start"() <{level = 10 : i32, message = "nqk,nkd->nqd"}> : () -> ()
    %cst_23 = arith.constant dense<0.000000e+00> : vector<4x8x8xf32>
    %29 = tpu.matmul %28, %8, %cst_23 {dimension_numbers = #tpu.dot_dimension_numbers<[2], [1], [1], [2], [0, 0, 0, 1, 1, 2], [0], [0]>} : vector<4x8x8xbf16>, vector<4x8x8xbf16>, vector<4x8x8xf32> -> vector<4x8x8xf32>
    "tpu.trace_stop"() : () -> ()
    %30 = arith.addf %27, %29 : vector<4x8x8xf32>
    %c0_24 = arith.constant 0 : index
    %c0_25 = arith.constant 0 : index
    %c0_26 = arith.constant 0 : index
    %31 = vector.load %arg9[%c0_24, %c0_25, %c0_26] : memref<4x8x8xf32, #tpu.memory_space<vmem>>, vector<4x8x8xf32>
    tpu.vector_store %arg9[%c0_24, %c0_25, %c0_26], %30 {strides = array<i32>} : memref<4x8x8xf32, #tpu.memory_space<vmem>>, vector<4x8x8xf32>,
    %c0_27 = arith.constant 0 : index
    %c0_28 = arith.constant 0 : index
    %32 = vector.load %arg7[%c0_27, %c0_28] : memref<4x8xf32, #tpu.memory_space<vmem>>, vector<4x8xf32>
    tpu.vector_store %arg7[%c0_27, %c0_28], %12 {strides = array<i32>} : memref<4x8xf32, #tpu.memory_space<vmem>>, vector<4x8xf32>,
    %c0_i32_29 = arith.constant 0 : i32
    %33 = arith.cmpi eq, %arg2, %c0_i32_29 : i32
    %34 = arith.extui %33 : i1 to i32
    %c0_i32_30 = arith.constant 0 : i32
    %35 = arith.cmpi ne, %34, %c0_i32_30 : i32
    scf.if %35 {
      %c0_31 = arith.constant 0 : index
      %c0_32 = arith.constant 0 : index
      %36 = vector.load %arg8[%c0_31, %c0_32] : memref<4x8xf32, #tpu.memory_space<vmem>>, vector<4x8xf32>
      %37 = tpu.reciprocal %36 {approx = true} : vector<4x8xf32> -> vector<4x8xf32>
      %c0_33 = arith.constant 0 : index
      %c0_34 = arith.constant 0 : index
      %c0_35 = arith.constant 0 : index
      %38 = vector.load %arg9[%c0_33, %c0_34, %c0_35] : memref<4x8x8xf32, #tpu.memory_space<vmem>>, vector<4x8x8xf32>
      %39 = vector.shape_cast %37 : vector<4x8xf32> to vector<4x8x1xf32>
      %40 = vector.broadcast %39 : vector<4x8x1xf32> to vector<4x8x8xf32>
      %41 = arith.mulf %38, %40 : vector<4x8x8xf32>
      %42 = arith.truncf %41 : vector<4x8x8xf32> to vector<4x8x8xbf16>
      %c0_36 = arith.constant 0 : index
      %c0_37 = arith.constant 0 : index
      %c0_38 = arith.constant 0 : index
      %c0_39 = arith.constant 0 : index
      %43 = vector.load %arg6[%c0_36, %c0_37, %c0_38, %c0_39] : memref<1x4x8x8xbf16, #tpu.memory_space<vmem>>, vector<1x4x8x8xbf16>
      %44 = vector.shape_cast %43 : vector<1x4x8x8xbf16> to vector<4x8x8xbf16>
      %45 = vector.shape_cast %42 : vector<4x8x8xbf16> to vector<1x4x8x8xbf16>
      tpu.vector_store %arg6[%c0_36, %c0_37, %c0_38, %c0_39], %45 {strides = array<i32>} : memref<1x4x8x8xbf16, #tpu.memory_space<vmem>>, vector<1x4x8x8xbf16>,
    } else {
    }
    return
  }
  func.func @transform_0(%arg0: i32, %arg1: i32, %arg2: i32) -> (i32, i32, i32, i32) {
    %c0_i32 = arith.constant 0 : i32
    %c0_i32_0 = arith.constant 0 : i32
    %c0_i32_1 = arith.constant 0 : i32
    return %arg0, %c0_i32, %arg1, %c0_i32_0 : i32, i32, i32, i32
  }
  func.func @transform_1(%arg0: i32, %arg1: i32, %arg2: i32) -> (i32, i32, i32, i32) {
    %c0_i32 = arith.constant 0 : i32
    %c0_i32_0 = arith.constant 0 : i32
    %c0_i32_1 = arith.constant 0 : i32
    return %arg0, %c0_i32, %arg2, %c0_i32_0 : i32, i32, i32, i32
  }
  func.func @transform_2(%arg0: i32, %arg1: i32, %arg2: i32) -> (i32, i32, i32, i32) {
    %c0_i32 = arith.constant 0 : i32
    %c0_i32_0 = arith.constant 0 : i32
    %c0_i32_1 = arith.constant 0 : i32
    return %arg0, %c0_i32, %arg2, %c0_i32_0 : i32, i32, i32, i32
  }
  func.func @transform_3(%arg0: i32, %arg1: i32, %arg2: i32) -> (i32, i32, i32, i32) {
    %c0_i32 = arith.constant 0 : i32
    %c0_i32_0 = arith.constant 0 : i32
    %c0_i32_1 = arith.constant 0 : i32
    return %arg0, %c0_i32, %arg1, %c0_i32_0 : i32, i32, i32, i32
  }
}

module attributes {stable_mosaic.version = 11 : i64} {
  func.func @_proj_res_ln_kernel(%arg0: i32, %arg1: i32, %arg2: i32, %arg3: memref<1x1x8x8xbf16, #tpu.memory_space<vmem>>, %arg4: memref<1x8x32xbf16, #tpu.memory_space<vmem>>, %arg5: memref<1x32xf32, #tpu.memory_space<vmem>>, %arg6: memref<1x8x32xbf16, #tpu.memory_space<vmem>>, %arg7: memref<1x32xf32, #tpu.memory_space<vmem>>, %arg8: memref<1x32xf32, #tpu.memory_space<vmem>>, %arg9: memref<1x8x32xbf16, #tpu.memory_space<vmem>>, %arg10: memref<8x32xf32, #tpu.memory_space<vmem>>) attributes {dimension_semantics = [#tpu.dimension_semantics<parallel>, #tpu.dimension_semantics<parallel>, #tpu.dimension_semantics<arbitrary>], iteration_bounds = array<i64: 2, 1, 4>, scalar_prefetch = 0 : i64, scratch_operands = 1 : i64, tpu.core_type = #tpu.core_type<tc>, window_params = [{transform_indices = @transform_0, window_bounds = array<i64: 1, 1, 8, 8>}, {transform_indices = @transform_1, window_bounds = array<i64: 1, 8, 32>}, {pipeline_mode = #tpu.pipeline_mode<synchronous>, transform_indices = @transform_2, window_bounds = array<i64: 1, 32>}, {transform_indices = @transform_3, window_bounds = array<i64: 1, 8, 32>}, {pipeline_mode = #tpu.pipeline_mode<synchronous>, transform_indices = @transform_4, window_bounds = array<i64: 1, 32>}, {pipeline_mode = #tpu.pipeline_mode<synchronous>, transform_indices = @transform_5, window_bounds = array<i64: 1, 32>}, {transform_indices = @transform_6, window_bounds = array<i64: 1, 8, 32>}]} {
    %c0 = arith.constant 0 : index
    %c0_0 = arith.constant 0 : index
    %c0_1 = arith.constant 0 : index
    %c0_2 = arith.constant 0 : index
    %0 = vector.load %arg3[%c0, %c0_0, %c0_1, %c0_2] : memref<1x1x8x8xbf16, #tpu.memory_space<vmem>>, vector<1x1x8x8xbf16>
    %1 = vector.shape_cast %0 : vector<1x1x8x8xbf16> to vector<8x8xbf16>
    %c0_3 = arith.constant 0 : index
    %c0_4 = arith.constant 0 : index
    %c0_5 = arith.constant 0 : index
    %2 = vector.load %arg4[%c0_3, %c0_4, %c0_5] : memref<1x8x32xbf16, #tpu.memory_space<vmem>>, vector<1x8x32xbf16>
    %3 = vector.shape_cast %2 : vector<1x8x32xbf16> to vector<8x32xbf16>
    %cst = arith.constant dense<0.000000e+00> : vector<8x32xf32>
    %4 = tpu.matmul %1, %3, %cst {dimension_numbers = #tpu.dot_dimension_numbers<[1], [0], [0], [1], [0, 0, 1, 1], [], []>} : vector<8x8xbf16>, vector<8x32xbf16>, vector<8x32xf32> -> vector<8x32xf32>
    %c0_i32 = arith.constant 0 : i32
    %5 = arith.cmpi eq, %arg2, %c0_i32 : i32
    %6 = arith.extui %5 : i1 to i32
    %c0_i32_6 = arith.constant 0 : i32
    %7 = arith.cmpi ne, %6, %c0_i32_6 : i32
    scf.if %7 {
      %c0_10 = arith.constant 0 : index
      %c0_11 = arith.constant 0 : index
      %14 = vector.load %arg10[%c0_10, %c0_11] : memref<8x32xf32, #tpu.memory_space<vmem>>, vector<8x32xf32>
      tpu.vector_store %arg10[%c0_10, %c0_11], %4 {strides = array<i32>} : memref<8x32xf32, #tpu.memory_space<vmem>>, vector<8x32xf32>,
    } else {
    }
    %c0_i32_7 = arith.constant 0 : i32
    %8 = arith.cmpi sgt, %arg2, %c0_i32_7 : i32
    %9 = arith.extui %8 : i1 to i32
    %c0_i32_8 = arith.constant 0 : i32
    %10 = arith.cmpi ne, %9, %c0_i32_8 : i32
    scf.if %10 {
      %c0_10 = arith.constant 0 : index
      %c0_11 = arith.constant 0 : index
      %14 = vector.load %arg10[%c0_10, %c0_11] : memref<8x32xf32, #tpu.memory_space<vmem>>, vector<8x32xf32>
      %15 = arith.addf %14, %4 : vector<8x32xf32>
      %c0_12 = arith.constant 0 : index
      %c0_13 = arith.constant 0 : index
      %16 = vector.load %arg10[%c0_12, %c0_13] : memref<8x32xf32, #tpu.memory_space<vmem>>, vector<8x32xf32>
      tpu.vector_store %arg10[%c0_12, %c0_13], %15 {strides = array<i32>} : memref<8x32xf32, #tpu.memory_space<vmem>>, vector<8x32xf32>,
    } else {
    }
    %c3_i32 = arith.constant 3 : i32
    %11 = arith.cmpi eq, %arg2, %c3_i32 : i32
    %12 = arith.extui %11 : i1 to i32
    %c0_i32_9 = arith.constant 0 : i32
    %13 = arith.cmpi ne, %12, %c0_i32_9 : i32
    scf.if %13 {
      %c0_10 = arith.constant 0 : index
      %c0_11 = arith.constant 0 : index
      %14 = vector.load %arg10[%c0_10, %c0_11] : memref<8x32xf32, #tpu.memory_space<vmem>>, vector<8x32xf32>
      %c0_12 = arith.constant 0 : index
      %c0_13 = arith.constant 0 : index
      %15 = vector.load %arg5[%c0_12, %c0_13] : memref<1x32xf32, #tpu.memory_space<vmem>>, vector<1x32xf32>
      %16 = vector.broadcast %15 : vector<1x32xf32> to vector<8x32xf32>
      %17 = arith.addf %14, %16 : vector<8x32xf32>
      %c0_14 = arith.constant 0 : index
      %c0_15 = arith.constant 0 : index
      %c0_16 = arith.constant 0 : index
      %18 = vector.load %arg6[%c0_14, %c0_15, %c0_16] : memref<1x8x32xbf16, #tpu.memory_space<vmem>>, vector<1x8x32xbf16>
      %19 = vector.shape_cast %18 : vector<1x8x32xbf16> to vector<8x32xbf16>
      %20 = arith.extf %19 : vector<8x32xbf16> to vector<8x32xf32>
      %21 = arith.addf %17, %20 : vector<8x32xf32>
      %c0_17 = arith.constant 0 : index
      %c0_18 = arith.constant 0 : index
      %22 = vector.load %arg7[%c0_17, %c0_18] : memref<1x32xf32, #tpu.memory_space<vmem>>, vector<1x32xf32>
      %c0_19 = arith.constant 0 : index
      %c0_20 = arith.constant 0 : index
      %23 = vector.load %arg8[%c0_19, %c0_20] : memref<1x32xf32, #tpu.memory_space<vmem>>, vector<1x32xf32>
      %cst_21 = arith.constant dense<0.000000e+00> : vector<8xf32>
      %24 = vector.multi_reduction <add>, %21, %cst_21 [1] : vector<8x32xf32> to vector<8xf32>
      %25 = vector.shape_cast %24 : vector<8xf32> to vector<8x1xf32>
      %cst_22 = arith.constant 3.200000e+01 : f32
      %26 = vector.broadcast %cst_22 : f32 to vector<8x1xf32>
      %27 = arith.divf %25, %26 : vector<8x1xf32>
      %28 = vector.broadcast %27 : vector<8x1xf32> to vector<8x32xf32>
      %29 = arith.subf %21, %28 : vector<8x32xf32>
      %30 = arith.mulf %29, %29 : vector<8x32xf32>
      %cst_23 = arith.constant dense<0.000000e+00> : vector<8xf32>
      %31 = vector.multi_reduction <add>, %30, %cst_23 [1] : vector<8x32xf32> to vector<8xf32>
      %32 = vector.shape_cast %31 : vector<8xf32> to vector<8x1xf32>
      %cst_24 = arith.constant 3.200000e+01 : f32
      %33 = vector.broadcast %cst_24 : f32 to vector<8x1xf32>
      %34 = arith.divf %32, %33 : vector<8x1xf32>
      %35 = vector.broadcast %27 : vector<8x1xf32> to vector<8x32xf32>
      %36 = arith.subf %21, %35 : vector<8x32xf32>
      %cst_25 = arith.constant 9.99999996E-13 : f32
      %37 = vector.broadcast %cst_25 : f32 to vector<8x1xf32>
      %38 = arith.addf %34, %37 : vector<8x1xf32>
      %39 = math.rsqrt %38 : vector<8x1xf32>
      %40 = vector.broadcast %39 : vector<8x1xf32> to vector<8x32xf32>
      %41 = arith.mulf %36, %40 : vector<8x32xf32>
      %42 = vector.broadcast %22 : vector<1x32xf32> to vector<8x32xf32>
      %43 = arith.mulf %41, %42 : vector<8x32xf32>
      %44 = vector.broadcast %23 : vector<1x32xf32> to vector<8x32xf32>
      %45 = arith.addf %43, %44 : vector<8x32xf32>
      %46 = arith.truncf %45 : vector<8x32xf32> to vector<8x32xbf16>
      %c0_26 = arith.constant 0 : index
      %c0_27 = arith.constant 0 : index
      %c0_28 = arith.constant 0 : index
      %47 = vector.load %arg9[%c0_26, %c0_27, %c0_28] : memref<1x8x32xbf16, #tpu.memory_space<vmem>>, vector<1x8x32xbf16>
      %48 = vector.shape_cast %47 : vector<1x8x32xbf16> to vector<8x32xbf16>
      %49 = vector.shape_cast %46 : vector<8x32xbf16> to vector<1x8x32xbf16>
      tpu.vector_store %arg9[%c0_26, %c0_27, %c0_28], %49 {strides = array<i32>} : memref<1x8x32xbf16, #tpu.memory_space<vmem>>, vector<1x8x32xbf16>,
    } else {
    }
    return
  }
  func.func @transform_0(%arg0: i32, %arg1: i32, %arg2: i32) -> (i32, i32, i32, i32) {
    %c0_i32 = arith.constant 0 : i32
    %c0_i32_0 = arith.constant 0 : i32
    return %arg0, %arg2, %arg1, %c0_i32 : i32, i32, i32, i32
  }
  func.func @transform_1(%arg0: i32, %arg1: i32, %arg2: i32) -> (i32, i32, i32) {
    %c0_i32 = arith.constant 0 : i32
    %c0_i32_0 = arith.constant 0 : i32
    %c0_i32_1 = arith.constant 0 : i32
    return %arg2, %c0_i32, %c0_i32_0 : i32, i32, i32
  }
  func.func @transform_2(%arg0: i32, %arg1: i32, %arg2: i32) -> (i32, i32) {
    %c0_i32 = arith.constant 0 : i32
    %c0_i32_0 = arith.constant 0 : i32
    %c0_i32_1 = arith.constant 0 : i32
    return %c0_i32, %c0_i32_0 : i32, i32
  }
  func.func @transform_3(%arg0: i32, %arg1: i32, %arg2: i32) -> (i32, i32, i32) {
    %c0_i32 = arith.constant 0 : i32
    %c0_i32_0 = arith.constant 0 : i32
    return %arg0, %arg1, %c0_i32 : i32, i32, i32
  }
  func.func @transform_4(%arg0: i32, %arg1: i32, %arg2: i32) -> (i32, i32) {
    %c0_i32 = arith.constant 0 : i32
    %c0_i32_0 = arith.constant 0 : i32
    %c0_i32_1 = arith.constant 0 : i32
    return %c0_i32, %c0_i32_0 : i32, i32
  }
  func.func @transform_5(%arg0: i32, %arg1: i32, %arg2: i32) -> (i32, i32) {
    %c0_i32 = arith.constant 0 : i32
    %c0_i32_0 = arith.constant 0 : i32
    %c0_i32_1 = arith.constant 0 : i32
    return %c0_i32, %c0_i32_0 : i32, i32
  }
  func.func @transform_6(%arg0: i32, %arg1: i32, %arg2: i32) -> (i32, i32, i32) {
    %c0_i32 = arith.constant 0 : i32
    %c0_i32_0 = arith.constant 0 : i32
    return %arg0, %arg1, %c0_i32 : i32, i32, i32
  }
}

module attributes {stable_mosaic.version = 11 : i64} {
  func.func @_ffn_kernel(%arg0: i32, %arg1: i32, %arg2: memref<16x32xbf16, #tpu.memory_space<vmem>>, %arg3: memref<32x64xbf16, #tpu.memory_space<vmem>>, %arg4: memref<1x64xf32, #tpu.memory_space<vmem>>, %arg5: memref<64x32xbf16, #tpu.memory_space<vmem>>, %arg6: memref<1x32xf32, #tpu.memory_space<vmem>>, %arg7: memref<1x32xf32, #tpu.memory_space<vmem>>, %arg8: memref<1x32xf32, #tpu.memory_space<vmem>>, %arg9: memref<16x32xbf16, #tpu.memory_space<vmem>>, %arg10: memref<16x32xf32, #tpu.memory_space<vmem>>) attributes {dimension_semantics = [#tpu.dimension_semantics<parallel>, #tpu.dimension_semantics<arbitrary>], iteration_bounds = array<i64: 1, 1>, scalar_prefetch = 0 : i64, scratch_operands = 1 : i64, tpu.core_type = #tpu.core_type<tc>, window_params = [{transform_indices = @transform_0, window_bounds = array<i64: 16, 32>}, {transform_indices = @transform_1, window_bounds = array<i64: 32, 64>}, {transform_indices = @transform_2, window_bounds = array<i64: 1, 64>}, {transform_indices = @transform_3, window_bounds = array<i64: 64, 32>}, {pipeline_mode = #tpu.pipeline_mode<synchronous>, transform_indices = @transform_4, window_bounds = array<i64: 1, 32>}, {pipeline_mode = #tpu.pipeline_mode<synchronous>, transform_indices = @transform_5, window_bounds = array<i64: 1, 32>}, {pipeline_mode = #tpu.pipeline_mode<synchronous>, transform_indices = @transform_6, window_bounds = array<i64: 1, 32>}, {transform_indices = @transform_7, window_bounds = array<i64: 16, 32>}]} {
    %c0 = arith.constant 0 : index
    %c0_0 = arith.constant 0 : index
    %0 = vector.load %arg2[%c0, %c0_0] : memref<16x32xbf16, #tpu.memory_space<vmem>>, vector<16x32xbf16>
    %c0_1 = arith.constant 0 : index
    %c0_2 = arith.constant 0 : index
    %1 = vector.load %arg3[%c0_1, %c0_2] : memref<32x64xbf16, #tpu.memory_space<vmem>>, vector<32x64xbf16>
    %cst = arith.constant dense<0.000000e+00> : vector<16x64xf32>
    %2 = tpu.matmul %0, %1, %cst {dimension_numbers = #tpu.dot_dimension_numbers<[1], [0], [0], [1], [0, 0, 1, 1], [], []>} : vector<16x32xbf16>, vector<32x64xbf16>, vector<16x64xf32> -> vector<16x64xf32>
    %c0_3 = arith.constant 0 : index
    %c0_4 = arith.constant 0 : index
    %3 = vector.load %arg4[%c0_3, %c0_4] : memref<1x64xf32, #tpu.memory_space<vmem>>, vector<1x64xf32>
    %4 = vector.broadcast %3 : vector<1x64xf32> to vector<16x64xf32>
    %5 = arith.addf %2, %4 : vector<16x64xf32>
    %cst_5 = arith.constant 5.000000e-01 : f32
    %6 = vector.broadcast %cst_5 : f32 to vector<16x64xf32>
    %7 = arith.mulf %6, %5 : vector<16x64xf32>
    %cst_6 = arith.constant 4.471500e-02 : f32
    %8 = vector.broadcast %cst_6 : f32 to vector<16x64xf32>
    %9 = arith.mulf %8, %5 : vector<16x64xf32>
    %10 = arith.mulf %9, %5 : vector<16x64xf32>
    %11 = arith.mulf %10, %5 : vector<16x64xf32>
    %12 = arith.addf %5, %11 : vector<16x64xf32>
    %cst_7 = arith.constant 0.797884583 : f32
    %13 = vector.broadcast %cst_7 : f32 to vector<16x64xf32>
    %14 = arith.mulf %13, %12 : vector<16x64xf32>
    %15 = math.tanh %14 : vector<16x64xf32>
    %cst_8 = arith.constant 1.000000e+00 : f32
    %16 = vector.broadcast %cst_8 : f32 to vector<16x64xf32>
    %17 = arith.addf %16, %15 : vector<16x64xf32>
    %18 = arith.mulf %7, %17 : vector<16x64xf32>
    %19 = arith.truncf %18 : vector<16x64xf32> to vector<16x64xbf16>
    %c0_9 = arith.constant 0 : index
    %c0_10 = arith.constant 0 : index
    %20 = vector.load %arg5[%c0_9, %c0_10] : memref<64x32xbf16, #tpu.memory_space<vmem>>, vector<64x32xbf16>
    %cst_11 = arith.constant dense<0.000000e+00> : vector<16x32xf32>
    %21 = tpu.matmul %19, %20, %cst_11 {dimension_numbers = #tpu.dot_dimension_numbers<[1], [0], [0], [1], [0, 0, 1, 1], [], []>} : vector<16x64xbf16>, vector<64x32xbf16>, vector<16x32xf32> -> vector<16x32xf32>
    %c0_i32 = arith.constant 0 : i32
    %22 = arith.cmpi eq, %arg1, %c0_i32 : i32
    %23 = arith.extui %22 : i1 to i32
    %c0_i32_12 = arith.constant 0 : i32
    %24 = arith.cmpi ne, %23, %c0_i32_12 : i32
    scf.if %24 {
      %c0_17 = arith.constant 0 : index
      %c0_18 = arith.constant 0 : index
      %31 = vector.load %arg10[%c0_17, %c0_18] : memref<16x32xf32, #tpu.memory_space<vmem>>, vector<16x32xf32>
      tpu.vector_store %arg10[%c0_17, %c0_18], %21 {strides = array<i32>} : memref<16x32xf32, #tpu.memory_space<vmem>>, vector<16x32xf32>,
    } else {
    }
    %c0_i32_13 = arith.constant 0 : i32
    %25 = arith.cmpi sgt, %arg1, %c0_i32_13 : i32
    %26 = arith.extui %25 : i1 to i32
    %c0_i32_14 = arith.constant 0 : i32
    %27 = arith.cmpi ne, %26, %c0_i32_14 : i32
    scf.if %27 {
      %c0_17 = arith.constant 0 : index
      %c0_18 = arith.constant 0 : index
      %31 = vector.load %arg10[%c0_17, %c0_18] : memref<16x32xf32, #tpu.memory_space<vmem>>, vector<16x32xf32>
      %32 = arith.addf %31, %21 : vector<16x32xf32>
      %c0_19 = arith.constant 0 : index
      %c0_20 = arith.constant 0 : index
      %33 = vector.load %arg10[%c0_19, %c0_20] : memref<16x32xf32, #tpu.memory_space<vmem>>, vector<16x32xf32>
      tpu.vector_store %arg10[%c0_19, %c0_20], %32 {strides = array<i32>} : memref<16x32xf32, #tpu.memory_space<vmem>>, vector<16x32xf32>,
    } else {
    }
    %c0_i32_15 = arith.constant 0 : i32
    %28 = arith.cmpi eq, %arg1, %c0_i32_15 : i32
    %29 = arith.extui %28 : i1 to i32
    %c0_i32_16 = arith.constant 0 : i32
    %30 = arith.cmpi ne, %29, %c0_i32_16 : i32
    scf.if %30 {
      %c0_17 = arith.constant 0 : index
      %c0_18 = arith.constant 0 : index
      %31 = vector.load %arg10[%c0_17, %c0_18] : memref<16x32xf32, #tpu.memory_space<vmem>>, vector<16x32xf32>
      %c0_19 = arith.constant 0 : index
      %c0_20 = arith.constant 0 : index
      %32 = vector.load %arg6[%c0_19, %c0_20] : memref<1x32xf32, #tpu.memory_space<vmem>>, vector<1x32xf32>
      %33 = vector.broadcast %32 : vector<1x32xf32> to vector<16x32xf32>
      %34 = arith.addf %31, %33 : vector<16x32xf32>
      %35 = arith.extf %0 : vector<16x32xbf16> to vector<16x32xf32>
      %36 = arith.addf %34, %35 : vector<16x32xf32>
      %c0_21 = arith.constant 0 : index
      %c0_22 = arith.constant 0 : index
      %37 = vector.load %arg7[%c0_21, %c0_22] : memref<1x32xf32, #tpu.memory_space<vmem>>, vector<1x32xf32>
      %c0_23 = arith.constant 0 : index
      %c0_24 = arith.constant 0 : index
      %38 = vector.load %arg8[%c0_23, %c0_24] : memref<1x32xf32, #tpu.memory_space<vmem>>, vector<1x32xf32>
      %cst_25 = arith.constant dense<0.000000e+00> : vector<16xf32>
      %39 = vector.multi_reduction <add>, %36, %cst_25 [1] : vector<16x32xf32> to vector<16xf32>
      %40 = vector.shape_cast %39 : vector<16xf32> to vector<16x1xf32>
      %cst_26 = arith.constant 3.200000e+01 : f32
      %41 = vector.broadcast %cst_26 : f32 to vector<16x1xf32>
      %42 = arith.divf %40, %41 : vector<16x1xf32>
      %43 = vector.broadcast %42 : vector<16x1xf32> to vector<16x32xf32>
      %44 = arith.subf %36, %43 : vector<16x32xf32>
      %45 = arith.mulf %44, %44 : vector<16x32xf32>
      %cst_27 = arith.constant dense<0.000000e+00> : vector<16xf32>
      %46 = vector.multi_reduction <add>, %45, %cst_27 [1] : vector<16x32xf32> to vector<16xf32>
      %47 = vector.shape_cast %46 : vector<16xf32> to vector<16x1xf32>
      %cst_28 = arith.constant 3.200000e+01 : f32
      %48 = vector.broadcast %cst_28 : f32 to vector<16x1xf32>
      %49 = arith.divf %47, %48 : vector<16x1xf32>
      %50 = vector.broadcast %42 : vector<16x1xf32> to vector<16x32xf32>
      %51 = arith.subf %36, %50 : vector<16x32xf32>
      %cst_29 = arith.constant 9.99999996E-13 : f32
      %52 = vector.broadcast %cst_29 : f32 to vector<16x1xf32>
      %53 = arith.addf %49, %52 : vector<16x1xf32>
      %54 = math.rsqrt %53 : vector<16x1xf32>
      %55 = vector.broadcast %54 : vector<16x1xf32> to vector<16x32xf32>
      %56 = arith.mulf %51, %55 : vector<16x32xf32>
      %57 = vector.broadcast %37 : vector<1x32xf32> to vector<16x32xf32>
      %58 = arith.mulf %56, %57 : vector<16x32xf32>
      %59 = vector.broadcast %38 : vector<1x32xf32> to vector<16x32xf32>
      %60 = arith.addf %58, %59 : vector<16x32xf32>
      %61 = arith.truncf %60 : vector<16x32xf32> to vector<16x32xbf16>
      %c0_30 = arith.constant 0 : index
      %c0_31 = arith.constant 0 : index
      %62 = vector.load %arg9[%c0_30, %c0_31] : memref<16x32xbf16, #tpu.memory_space<vmem>>, vector<16x32xbf16>
      tpu.vector_store %arg9[%c0_30, %c0_31], %61 {strides = array<i32>} : memref<16x32xbf16, #tpu.memory_space<vmem>>, vector<16x32xbf16>,
    } else {
    }
    return
  }
  func.func @transform_0(%arg0: i32, %arg1: i32) -> (i32, i32) {
    %c0_i32 = arith.constant 0 : i32
    %c0_i32_0 = arith.constant 0 : i32
    return %arg0, %c0_i32 : i32, i32
  }
  func.func @transform_1(%arg0: i32, %arg1: i32) -> (i32, i32) {
    %c0_i32 = arith.constant 0 : i32
    %c0_i32_0 = arith.constant 0 : i32
    return %c0_i32, %arg1 : i32, i32
  }
  func.func @transform_2(%arg0: i32, %arg1: i32) -> (i32, i32) {
    %c0_i32 = arith.constant 0 : i32
    %c0_i32_0 = arith.constant 0 : i32
    return %c0_i32, %arg1 : i32, i32
  }
  func.func @transform_3(%arg0: i32, %arg1: i32) -> (i32, i32) {
    %c0_i32 = arith.constant 0 : i32
    %c0_i32_0 = arith.constant 0 : i32
    return %arg1, %c0_i32 : i32, i32
  }
  func.func @transform_4(%arg0: i32, %arg1: i32) -> (i32, i32) {
    %c0_i32 = arith.constant 0 : i32
    %c0_i32_0 = arith.constant 0 : i32
    %c0_i32_1 = arith.constant 0 : i32
    return %c0_i32, %c0_i32_0 : i32, i32
  }
  func.func @transform_5(%arg0: i32, %arg1: i32) -> (i32, i32) {
    %c0_i32 = arith.constant 0 : i32
    %c0_i32_0 = arith.constant 0 : i32
    %c0_i32_1 = arith.constant 0 : i32
    return %c0_i32, %c0_i32_0 : i32, i32
  }
  func.func @transform_6(%arg0: i32, %arg1: i32) -> (i32, i32) {
    %c0_i32 = arith.constant 0 : i32
    %c0_i32_0 = arith.constant 0 : i32
    %c0_i32_1 = arith.constant 0 : i32
    return %c0_i32, %c0_i32_0 : i32, i32
  }
  func.func @transform_7(%arg0: i32, %arg1: i32) -> (i32, i32) {
    %c0_i32 = arith.constant 0 : i32
    %c0_i32_0 = arith.constant 0 : i32
    return %arg0, %c0_i32 : i32, i32
  }
}

</mosaic_0001>

<llo_original>
// kernel: tess_transformer_forward.10
$region0: #{tess_transformer_forward.10}
  #allocation0 [shape = 'u32[]', space=smem, size = 0x4, offset = 0x4, fixed_abs, tag = 'smem constant byte address 0x4 - core index']
  #allocation1 [shape = 'u32[72,128]{1,0:T(1,128)}', space=vmem, size = 0x9000, scoped, tag = 'internal scratch']
  #allocation2 [shape = 'f32[16,96]{1,0:T(8,128)}', space=vmem, size = 0x2000, scoped, tag = 'scratch operand']
  %s0 = inlined_call_operand.vmem [shape: bf16[16,32], index: 0, kind: input, shape index: {}]
  %s1 = inlined_call_operand.vmem [shape: bf16[32,96], index: 1, kind: input, shape index: {}]
  %s2 = inlined_call_operand.vmem [shape: f32[1,96], index: 2, kind: input, shape index: {}]
  %s3 = inlined_call_operand.vmem [shape: bf16[16,96], index: 3, kind: output, shape index: {}]
  %s4 = sld [smem:[#allocation0]]
  $region34: #{tess_transformer_forward.10} parent=0
    _
  %s6 = ssub.s32 1, %s4
  %s7 = scalar_select 0, %s6, %s4
  // Predicated region
  $region2: #{tess_transformer_forward.10} parent=0 // pred_check
    _
  $region3: #{tess_transformer_forward.10} parent=0 // pred_check_branch
    %9 = sbr.rel (0) target = $region5
  $region4: #{tess_transformer_forward.10} parent=0 // pred_region
    _
  $region5: #{tess_transformer_forward.10} parent=0 // pred_fallthru
    _
  // Predicated region
  $region6: #{tess_transformer_forward.10} parent=0 // pred_check
    _
  $region7: #{tess_transformer_forward.10} parent=0 // pred_check_branch
    %11 = sbr.rel (0) target = $region9
  $region8: #{tess_transformer_forward.10} parent=0 // pred_region
    _
  $region9: #{tess_transformer_forward.10} parent=0 // pred_fallthru
    _
  // Predicated region
  $region10: #{tess_transformer_forward.10} parent=0 // pred_check
    _
  $region11: #{tess_transformer_forward.10} parent=0 // pred_check_branch
    %13 = sbr.rel (0) target = $region13
  $region12: #{tess_transformer_forward.10} parent=0 // pred_region
    _
  $region13: #{tess_transformer_forward.10} parent=0 // pred_fallthru
    _
  %v15 = vld [vmem:[%s0] sm:$0xf]
  %v16 = vld [vmem:[%s0 + $0x4] sm:$0xf]
  %v17 = vld [vmem:[%s1] sm:$0xf]
  %v18 = vld [vmem:[%s1 + $0x4] sm:$0xf]
  %v19 = vld [vmem:[%s1 + $0x8] sm:$0xf]
  %v20 = vld [vmem:[%s1 + $0xc] sm:$0xf]
  %v23 = vunpack.c.l.b16 %v15
  %v24 = vunpack.c.l.b16 %v16
  %v25 = vpack.c.b16 %v24, %v23
  %v30 = vunpack.c.l.b16 %v17
  %v31 = vunpack.c.l.b16 %v18
  %v32 = vunpack.c.l.b16 %v19
  %v33 = vunpack.c.l.b16 %v20
  %v34 = vpack.c.b16 %v31, %v30
  %v35 = vpack.c.b16 %v33, %v32
  %vm38 = vcmask 261120
  %v40 = vsel %vm38, %v25, 0
  %42 = vmatpush.bf16.msra.mxu0 0
  %43 = vmatpush.bf16.msra.mxu0 0
  %44 = vmatpush.bf16.msra.mxu0 0
  %45 = vmatpush.bf16.msra.mxu0 0
  %46 = vmatpush.bf16.msra.mxu0 0
  %47 = vmatpush.bf16.msra.mxu0 0
  %48 = vmatpush.bf16.msra.mxu0 %v35
  %49 = vmatpush.bf16.msra.mxu0 %v34
  %50 = vmatmul.bf16.gmra.mxu0 %v40
  %v51 = vpop.f32.mrf.mxu0
  %v52 = vadd.f32 0.0, %v51
  %v53 = vpop.f32.mrf.mxu0
  %v54 = vadd.f32 0.0, %v53
  %55 = vdwg.mxu0
  %p56 = scmp.eq.s32.totalorder 0, 0
  // Predicated region
  $region14: #{tess_transformer_forward.10} parent=0 // pred_check
    %p57 = pneg %p56
  $region15: #{tess_transformer_forward.10} parent=0 // pred_check_branch
    %59 = sbr.rel (%p57) target = $region17
  $region16: #{tess_transformer_forward.10} parent=0 // pred_region
    %vm60 = vcmask 785408
    %61 = vst.msk [vmem:[#allocation2] sm:$0xff] %vm60, %v52
    %62 = vst.msk [vmem:[#allocation2 + $0x8] sm:$0xff] %vm60, %v54
  $region17: #{tess_transformer_forward.10} parent=0 // pred_fallthru
    _
  %p63 = scmp.gt.s32.totalorder 0, 0
  // Predicated region
  $region18: #{tess_transformer_forward.10} parent=0 // pred_check
    %p64 = pneg %p63
  $region19: #{tess_transformer_forward.10} parent=0 // pred_check_branch
    %66 = sbr.rel (%p64) target = $region21
  $region20: #{tess_transformer_forward.10} parent=0 // pred_region
    %v67 = vld [vmem:[#allocation2] sm:$0xff]
    %v68 = vld [vmem:[#allocation2 + $0x8] sm:$0xff]
    %v69 = vadd.f32 %v67, %v52
    %v70 = vadd.f32 %v68, %v54
    %vm71 = vcmask 785408
    %72 = vst.msk [vmem:[#allocation2] sm:$0xff] %vm71, %v69
    %73 = vst.msk [vmem:[#allocation2 + $0x8] sm:$0xff] %vm71, %v70
  $region21: #{tess_transformer_forward.10} parent=0 // pred_fallthru
    _
  // Predicated region
  $region22: #{tess_transformer_forward.10} parent=0 // pred_check
    %p74 = pneg %p56
  $region23: #{tess_transformer_forward.10} parent=0 // pred_check_branch
    %76 = sbr.rel (%p74) target = $region25
  $region24: #{tess_transformer_forward.10} parent=0 // pred_region
    %v77 = vld [vmem:[#allocation2] sm:$0xff]
    %v78 = vld [vmem:[#allocation2 + $0x8] sm:$0xff]
    %v79 = vld [vmem:[%s2] sm:$0x1]
    %v81 = vperm.slane %v79, 0
    %v83 = vadd.f32 %v77, %v81
    %v84 = vadd.f32 %v78, %v81
    %v85 = vpack.c.bf16 %v83, %v83
    %v86 = vpack.c.bf16 %v84, %v84
    %vm87 = vcmask 781312
    %88 = vst.msk [vmem:[%s3] sm:$0xf] %vm87, %v85
    %89 = vst.msk [vmem:[%s3 + $0x4] sm:$0xf] %vm87, %v86
  $region25: #{tess_transformer_forward.10} parent=0 // pred_fallthru
    _
  // Predicated region
  $region26: #{tess_transformer_forward.10} parent=0 // pred_check
    _
  $region27: #{tess_transformer_forward.10} parent=0 // pred_check_branch
    %91 = sbr.rel (0) target = $region29
  $region28: #{tess_transformer_forward.10} parent=0 // pred_region
    _
  $region29: #{tess_transformer_forward.10} parent=0 // pred_fallthru
    _
  // Predicated region
  $region30: #{tess_transformer_forward.10} parent=0 // pred_check
    _
  $region31: #{tess_transformer_forward.10} parent=0 // pred_check_branch
    %93 = sbr.rel (0) target = $region33
  $region32: #{tess_transformer_forward.10} parent=0 // pred_region
    _
  $region33: #{tess_transformer_forward.10} parent=0 // pred_fallthru
    _

// kernel: tess_transformer_forward.9
$region0: #{tess_transformer_forward.9}
  #allocation0 [shape = 'u32[]', space=smem, size = 0x4, offset = 0x4, fixed_abs, tag = 'smem constant byte address 0x4 - core index']
  #allocation1 [shape = 'u32[72,128]{1,0:T(1,128)}', space=vmem, size = 0x9000, scoped, tag = 'internal scratch']
  #allocation2 [shape = 'f32[16,32]{1,0:T(8,128)}', space=vmem, size = 0x2000, scoped, tag = 'scratch operand']
  %s0 = inlined_call_operand.vmem [shape: bf16[16,16], index: 0, kind: input, shape index: {}]
  %s1 = inlined_call_operand.vmem [shape: bf16[16,32], index: 1, kind: input, shape index: {}]
  %s2 = inlined_call_operand.vmem [shape: f32[1,32], index: 2, kind: input, shape index: {}]
  %s3 = inlined_call_operand.vmem [shape: bf16[16,32], index: 3, kind: output, shape index: {}]
  %s4 = sld [smem:[#allocation0]]
  $region34: #{tess_transformer_forward.9} parent=0
    _
  %s6 = ssub.s32 1, %s4
  %s7 = scalar_select 0, %s6, %s4
  // Predicated region
  $region2: #{tess_transformer_forward.9} parent=0 // pred_check
    _
  $region3: #{tess_transformer_forward.9} parent=0 // pred_check_branch
    %9 = sbr.rel (0) target = $region5
  $region4: #{tess_transformer_forward.9} parent=0 // pred_region
    _
  $region5: #{tess_transformer_forward.9} parent=0 // pred_fallthru
    _
  // Predicated region
  $region6: #{tess_transformer_forward.9} parent=0 // pred_check
    _
  $region7: #{tess_transformer_forward.9} parent=0 // pred_check_branch
    %11 = sbr.rel (0) target = $region9
  $region8: #{tess_transformer_forward.9} parent=0 // pred_region
    _
  $region9: #{tess_transformer_forward.9} parent=0 // pred_fallthru
    _
  // Predicated region
  $region10: #{tess_transformer_forward.9} parent=0 // pred_check
    _
  $region11: #{tess_transformer_forward.9} parent=0 // pred_check_branch
    %13 = sbr.rel (0) target = $region13
  $region12: #{tess_transformer_forward.9} parent=0 // pred_region
    _
  $region13: #{tess_transformer_forward.9} parent=0 // pred_fallthru
    _
  %v15 = vld [vmem:[%s0] sm:$0xf]
  %v16 = vld [vmem:[%s0 + $0x4] sm:$0xf]
  %v17 = vld [vmem:[%s1] sm:$0xf]
  %v18 = vld [vmem:[%s1 + $0x4] sm:$0xf]
  %v21 = vunpack.c.l.b16 %v15
  %v22 = vunpack.c.l.b16 %v16
  %v23 = vpack.c.b16 %v22, %v21
  %v26 = vunpack.c.l.b16 %v17
  %v27 = vunpack.c.l.b16 %v18
  %v28 = vpack.c.b16 %v27, %v26
  %vm30 = vcmask 130048
  %v32 = vsel %vm30, %v23, 0
  %34 = vmatpush.bf16.msra.mxu0 0
  %35 = vmatpush.bf16.msra.mxu0 0
  %36 = vmatpush.bf16.msra.mxu0 0
  %37 = vmatpush.bf16.msra.mxu0 0
  %38 = vmatpush.bf16.msra.mxu0 0
  %39 = vmatpush.bf16.msra.mxu0 0
  %40 = vmatpush.bf16.msra.mxu0 0
  %41 = vmatpush.bf16.msra.mxu0 %v28
  %42 = vmatmul.bf16.gmra.mxu0 %v32
  %v43 = vpop.f32.mrf.mxu0
  %v44 = vadd.f32 0.0, %v43
  %v45 = vpop.f32.mrf.mxu0
  %v46 = vadd.f32 0.0, %v45
  %47 = vdwg.mxu0
  %p48 = scmp.eq.s32.totalorder 0, 0
  // Predicated region
  $region14: #{tess_transformer_forward.9} parent=0 // pred_check
    %p49 = pneg %p48
  $region15: #{tess_transformer_forward.9} parent=0 // pred_check_branch
    %51 = sbr.rel (%p49) target = $region17
  $region16: #{tess_transformer_forward.9} parent=0 // pred_region
    %vm52 = vcmask 261120
    %53 = vst.msk [vmem:[#allocation2] sm:$0xff] %vm52, %v44
    %54 = vst.msk [vmem:[#allocation2 + $0x8] sm:$0xff] %vm52, %v46
  $region17: #{tess_transformer_forward.9} parent=0 // pred_fallthru
    _
  %p55 = scmp.gt.s32.totalorder 0, 0
  // Predicated region
  $region18: #{tess_transformer_forward.9} parent=0 // pred_check
    %p56 = pneg %p55
  $region19: #{tess_transformer_forward.9} parent=0 // pred_check_branch
    %58 = sbr.rel (%p56) target = $region21
  $region20: #{tess_transformer_forward.9} parent=0 // pred_region
    %v59 = vld [vmem:[#allocation2] sm:$0xff]
    %v60 = vld [vmem:[#allocation2 + $0x8] sm:$0xff]
    %v61 = vadd.f32 %v59, %v44
    %v62 = vadd.f32 %v60, %v46
    %vm63 = vcmask 261120
    %64 = vst.msk [vmem:[#allocation2] sm:$0xff] %vm63, %v61
    %65 = vst.msk [vmem:[#allocation2 + $0x8] sm:$0xff] %vm63, %v62
  $region21: #{tess_transformer_forward.9} parent=0 // pred_fallthru
    _
  // Predicated region
  $region22: #{tess_transformer_forward.9} parent=0 // pred_check
    %p66 = pneg %p48
  $region23: #{tess_transformer_forward.9} parent=0 // pred_check_branch
    %68 = sbr.rel (%p66) target = $region25
  $region24: #{tess_transformer_forward.9} parent=0 // pred_region
    %v69 = vld [vmem:[#allocation2] sm:$0xff]
    %v70 = vld [vmem:[#allocation2 + $0x8] sm:$0xff]
    %v71 = vld [vmem:[%s2] sm:$0x1]
    %v73 = vperm.slane %v71, 0
    %v75 = vadd.f32 %v69, %v73
    %v76 = vadd.f32 %v70, %v73
    %v77 = vpack.c.bf16 %v75, %v75
    %v78 = vpack.c.bf16 %v76, %v76
    %vm79 = vcmask 257024
    %80 = vst.msk [vmem:[%s3] sm:$0xf] %vm79, %v77
    %81 = vst.msk [vmem:[%s3 + $0x4] sm:$0xf] %vm79, %v78
  $region25: #{tess_transformer_forward.9} parent=0 // pred_fallthru
    _
  // Predicated region
  $region26: #{tess_transformer_forward.9} parent=0 // pred_check
    _
  $region27: #{tess_transformer_forward.9} parent=0 // pred_check_branch
    %83 = sbr.rel (0) target = $region29
  $region28: #{tess_transformer_forward.9} parent=0 // pred_region
    _
  $region29: #{tess_transformer_forward.9} parent=0 // pred_fallthru
    _
  // Predicated region
  $region30: #{tess_transformer_forward.9} parent=0 // pred_check
    _
  $region31: #{tess_transformer_forward.9} parent=0 // pred_check_branch
    %85 = sbr.rel (0) target = $region33
  $region32: #{tess_transformer_forward.9} parent=0 // pred_region
    _
  $region33: #{tess_transformer_forward.9} parent=0 // pred_fallthru
    _

// kernel: tess_transformer_forward.11
$region0: #{tess_transformer_forward.11}
  #allocation0 [shape = 'u32[]', space=smem, size = 0x4, offset = 0x4, fixed_abs, tag = 'smem constant byte address 0x4 - core index']
  #allocation1 [shape = 'u32[72,128]{1,0:T(1,128)}', space=vmem, size = 0x9000, scoped, tag = 'internal scratch']
  #allocation2 [shape = 'f32[4,8]{1,0:T(4,128)}', space=vmem, size = 0x800, scoped, tag = 'scratch operand']
  #allocation3 [shape = 'f32[4,8]{1,0:T(4,128)}', space=vmem, size = 0x800, scoped, tag = 'scratch operand']
  #allocation4 [shape = 'f32[4,8,8]{2,1,0:T(8,128)}', space=vmem, size = 0x4000, scoped, tag = 'scratch operand']
  %s0 = inlined_call_operand.vmem [shape: bf16[2,4,8,8], index: 0, kind: input, shape index: {}]
  %s1 = inlined_call_operand.vmem [shape: bf16[2,4,8,8], index: 1, kind: input, shape index: {}]
  %s2 = inlined_call_operand.vmem [shape: bf16[2,4,8,8], index: 2, kind: input, shape index: {}]
  %s3 = inlined_call_operand.vmem [shape: bf16[2,4,8,8], index: 3, kind: output, shape index: {}]
  %s4 = sld [smem:[#allocation0]]
  $region53: #{tess_transformer_forward.11} parent=0
    _
  %s6 = ssub.s32 1, %s4
  %s7 = scalar_select 0, %s6, %s4
  loop: start=0, step=1, limit=4
  $region2: #{tess_transformer_forward.11} parent=0 // loop_pre_header
    _
  $region3: #{tess_transformer_forward.11} parent=0 // loop_header
    %s9 = sphi 0, %s13
    %p10 = scmp.ge.s32.totalorder %s9, 4
    %s16 = sphi 0, %s35
    %s17 = sphi 0, %s31
    %s18 = sphi 0, %s27
    %s19 = sphi 0, %s16
    %s20 = sphi 0, %s17
    %s21 = sphi 0, %s18
    %s22 = sphi 0, %s19
    %s23 = sphi 0, %s20
    %s24 = sphi 0, %s21
    %s40 = sphi 0, %s42
    %s43 = sphi 0, %s40
    %s44 = sphi 0, %s43
    %s60 = sphi 0, %s44
    %s68 = sphi 0, %s70
    %s71 = sphi 0, %s68
    %s72 = sphi 0, %s71
    %s88 = sphi 0, %s72
    %s96 = sphi 0, %s98
    %s99 = sphi 0, %s96
    %s100 = sphi 0, %s99
    %s116 = sphi 0, %s100
    %s124 = sphi 0, %s126
    %s127 = sphi 0, %s124
    %s128 = sphi 0, %s127
    %s144 = sphi 0, %s128
  $region4: #{tess_transformer_forward.11} parent=0 // loop_header_branch
    %12 = sbr.rel (%p10) target = $region8
  $region5: #{tess_transformer_forward.11} parent=0 // loop_body
    %s14 = ssub.s32 %s9, 1
    %s15 = ssub.s32 %s9, 2
    %s25 = sadd.s32 1, %s18
    %p26 = scmp.ge.s32.totalorder %s25, 1
    %s27 = scalar_select %p26, 0, %s25
    %s28 = sadd.s32 1, %s17
    %s29 = scalar_select %p26, %s28, %s17
    %p30 = scmp.ge.s32.totalorder %s29, 1
    %s31 = scalar_select %p30, 0, %s29
    %s32 = sadd.s32 1, %s16
    %s33 = scalar_select %p30, %s32, %s16
    %p34 = scmp.ge.s32.totalorder %s33, 2
    %s35 = scalar_select %p34, 0, %s33
    %s36 = ssub.s32 %s16, %s35
    %s37 = ssub.s32 %s17, %s31
    %s38 = sor.u32 %s36, %s37
    %p39 = scmp.eq.s32.totalorder %s38, 0
    %s41 = sadd.s32 %s40, 1
    %s42 = scalar_select %p39, %s40, %s41
    %p45 = pneg %p39
    %p46 = scmp.eq.s32.totalorder %s9, 1
    %p47 = por %p45, %p46
    %p48 = scmp.ne.s32.totalorder %s40, %s43
    %p49 = scmp.eq.s32.totalorder %s9, 0
    %p50 = por %p48, %p49
    %p51 = scmp.ne.s32.totalorder %s40, %s43
    %p52 = scmp.eq.s32.totalorder %s14, 1
    %p53 = por %p51, %p52
    %p54 = scmp.ne.s32.totalorder %s43, %s44
    %p55 = scmp.eq.s32.totalorder %s14, 0
    %p56 = por %p54, %p55
    %p57 = scmp.ne.s32.totalorder %s43, %s44
    %p58 = scmp.eq.s32.totalorder %s15, 1
    %p59 = por %p57, %p58
    %p61 = scmp.ne.s32.totalorder %s44, %s60
    %p62 = scmp.eq.s32.totalorder %s15, 0
    %p63 = por %p61, %p62
    %s64 = ssub.s32 %s16, %s35
    %s65 = ssub.s32 %s18, %s27
    %s66 = sor.u32 %s64, %s65
    %p67 = scmp.eq.s32.totalorder %s66, 0
    %s69 = sadd.s32 %s68, 1
    %s70 = scalar_select %p67, %s68, %s69
    %p73 = pneg %p67
    %p74 = scmp.eq.s32.totalorder %s9, 1
    %p75 = por %p73, %p74
    %p76 = scmp.ne.s32.totalorder %s68, %s71
    %p77 = scmp.eq.s32.totalorder %s9, 0
    %p78 = por %p76, %p77
    %p79 = scmp.ne.s32.totalorder %s68, %s71
    %p80 = scmp.eq.s32.totalorder %s14, 1
    %p81 = por %p79, %p80
    %p82 = scmp.ne.s32.totalorder %s71, %s72
    %p83 = scmp.eq.s32.totalorder %s14, 0
    %p84 = por %p82, %p83
    %p85 = scmp.ne.s32.totalorder %s71, %s72
    %p86 = scmp.eq.s32.totalorder %s15, 1
    %p87 = por %p85, %p86
    %p89 = scmp.ne.s32.totalorder %s72, %s88
    %p90 = scmp.eq.s32.totalorder %s15, 0
    %p91 = por %p89, %p90
    %s92 = ssub.s32 %s16, %s35
    %s93 = ssub.s32 %s18, %s27
    %s94 = sor.u32 %s92, %s93
    %p95 = scmp.eq.s32.totalorder %s94, 0
    %s97 = sadd.s32 %s96, 1
    %s98 = scalar_select %p95, %s96, %s97
    %p101 = pneg %p95
    %p102 = scmp.eq.s32.totalorder %s9, 1
    %p103 = por %p101, %p102
    %p104 = scmp.ne.s32.totalorder %s96, %s99
    %p105 = scmp.eq.s32.totalorder %s9, 0
    %p106 = por %p104, %p105
    %p107 = scmp.ne.s32.totalorder %s96, %s99
    %p108 = scmp.eq.s32.totalorder %s14, 1
    %p109 = por %p107, %p108
    %p110 = scmp.ne.s32.totalorder %s99, %s100
    %p111 = scmp.eq.s32.totalorder %s14, 0
    %p112 = por %p110, %p111
    %p113 = scmp.ne.s32.totalorder %s99, %s100
    %p114 = scmp.eq.s32.totalorder %s15, 1
    %p115 = por %p113, %p114
    %p117 = scmp.ne.s32.totalorder %s100, %s116
    %p118 = scmp.eq.s32.totalorder %s15, 0
    %p119 = por %p117, %p118
    %s120 = ssub.s32 %s16, %s35
    %s121 = ssub.s32 %s17, %s31
    %s122 = sor.u32 %s120, %s121
    %p123 = scmp.eq.s32.totalorder %s122, 0
    %s125 = sadd.s32 %s124, 1
    %s126 = scalar_select %p123, %s124, %s125
    %p129 = pneg %p123
    %p130 = scmp.eq.s32.totalorder %s9, 1
    %p131 = por %p129, %p130
    %p132 = scmp.ne.s32.totalorder %s124, %s127
    %p133 = scmp.eq.s32.totalorder %s9, 0
    %p134 = por %p132, %p133
    %p135 = scmp.ne.s32.totalorder %s124, %s127
    %p136 = scmp.eq.s32.totalorder %s14, 1
    %p137 = por %p135, %p136
    %p138 = scmp.ne.s32.totalorder %s127, %s128
    %p139 = scmp.eq.s32.totalorder %s14, 0
    %p140 = por %p138, %p139
    %p141 = scmp.ne.s32.totalorder %s127, %s128
    %p142 = scmp.eq.s32.totalorder %s15, 1
    %p143 = por %p141, %p142
    %p145 = scmp.ne.s32.totalorder %s128, %s144
    %p146 = scmp.eq.s32.totalorder %s15, 0
    %p147 = por %p145, %p146
    %p148 = scmp.le.s32.totalorder 1, %s9
    %p149 = scmp.lt.s32.totalorder %s9, 3
    %p150 = pnand %p148, %p149
    %p151 = pneg %p150
    // Predicated region
    $region9: #{tess_transformer_forward.11} parent=5 // pred_check
      _
    $region10: #{tess_transformer_forward.11} parent=5 // pred_check_branch
      %153 = sbr.rel (%p150) target = $region12
    $region11: #{tess_transformer_forward.11} parent=5 // pred_region
      %s154 = ssub.s32 %s9, 1
    $region12: #{tess_transformer_forward.11} parent=5 // pred_fallthru
      _
    %p155 = scmp.lt.s32.totalorder %s9, 2
    // Predicated region
    $region13: #{tess_transformer_forward.11} parent=5 // pred_check
      %p156 = pneg %p155
    $region14: #{tess_transformer_forward.11} parent=5 // pred_check_branch
      %158 = sbr.rel (%p156) target = $region16
    $region15: #{tess_transformer_forward.11} parent=5 // pred_region
      // Predicated region
      $region17: #{tess_transformer_forward.11} parent=15 // pred_check
        %p159 = pneg %p50
      $region18: #{tess_transformer_forward.11} parent=15 // pred_check_branch
        %161 = sbr.rel (%p159) target = $region20
      $region19: #{tess_transformer_forward.11} parent=15 // pred_region
        %p162 = scmp.lt.s32.totalorder %s16, 1
        %s163 = scalar_select %p162, %s16, 1
        %p164 = scmp.lt.s32.totalorder %s17, 0
        %s165 = scalar_select %p164, %s17, 0
        %s166 = smul.addr %s163, 4
        %s167 = sadd.s32 %s165, %s166
        %s168 = smul.addr %s167, 4
        %s169 = scalar_lea.vmem %s0, %s168
      $region20: #{tess_transformer_forward.11} parent=15 // pred_fallthru
        _
      // Predicated region
      $region21: #{tess_transformer_forward.11} parent=15 // pred_check
        %p170 = pneg %p78
      $region22: #{tess_transformer_forward.11} parent=15 // pred_check_branch
        %172 = sbr.rel (%p170) target = $region24
      $region23: #{tess_transformer_forward.11} parent=15 // pred_region
        %p173 = scmp.lt.s32.totalorder %s16, 1
        %s174 = scalar_select %p173, %s16, 1
        %p175 = scmp.lt.s32.totalorder %s18, 0
        %s176 = scalar_select %p175, %s18, 0
        %s177 = smul.addr %s174, 4
        %s178 = sadd.s32 %s176, %s177
        %s179 = smul.addr %s178, 4
        %s180 = scalar_lea.vmem %s1, %s179
      $region24: #{tess_transformer_forward.11} parent=15 // pred_fallthru
        _
      // Predicated region
      $region25: #{tess_transformer_forward.11} parent=15 // pred_check
        %p181 = pneg %p106
      $region26: #{tess_transformer_forward.11} parent=15 // pred_check_branch
        %183 = sbr.rel (%p181) target = $region28
      $region27: #{tess_transformer_forward.11} parent=15 // pred_region
        %p184 = scmp.lt.s32.totalorder %s16, 1
        %s185 = scalar_select %p184, %s16, 1
        %p186 = scmp.lt.s32.totalorder %s18, 0
        %s187 = scalar_select %p186, %s18, 0
        %s188 = smul.addr %s185, 4
        %s189 = sadd.s32 %s187, %s188
        %s190 = smul.addr %s189, 4
        %s191 = scalar_lea.vmem %s2, %s190
      $region28: #{tess_transformer_forward.11} parent=15 // pred_fallthru
        _
    $region16: #{tess_transformer_forward.11} parent=5 // pred_fallthru
      _
    %p192 = scmp.le.s32.totalorder 1, %s9
    %p193 = scmp.lt.s32.totalorder %s9, 3
    %p194 = pnand %p192, %p193
    %p195 = pneg %p194
    // Predicated region
    $region29: #{tess_transformer_forward.11} parent=5 // pred_check
      _
    $region30: #{tess_transformer_forward.11} parent=5 // pred_check_branch
      %197 = sbr.rel (%p194) target = $region32
    $region31: #{tess_transformer_forward.11} parent=5 // pred_region
      %s198 = ssub.s32 %s9, 1
      %p199 = scmp.lt.s32.totalorder %s19, 1
      %s200 = scalar_select %p199, %s19, 1
      %p201 = scmp.lt.s32.totalorder %s20, 0
      %s202 = scalar_select %p201, %s20, 0
      %s203 = smul.addr %s200, 4
      %s204 = sadd.s32 %s202, %s203
      %s205 = smul.addr %s204, 4
      %s206 = scalar_lea.vmem %s0, %s205
      %p207 = pneg %p56
      %p208 = pneg %p53
      %p209 = scmp.lt.s32.totalorder %s19, 1
      %s210 = scalar_select %p209, %s19, 1
      %p211 = scmp.lt.s32.totalorder %s21, 0
      %s212 = scalar_select %p211, %s21, 0
      %s213 = smul.addr %s210, 4
      %s214 = sadd.s32 %s212, %s213
      %s215 = smul.addr %s214, 4
      %s216 = scalar_lea.vmem %s1, %s215
      %p217 = pneg %p84
      %p218 = pneg %p81
      %p219 = scmp.lt.s32.totalorder %s19, 1
      %s220 = scalar_select %p219, %s19, 1
      %p221 = scmp.lt.s32.totalorder %s21, 0
      %s222 = scalar_select %p221, %s21, 0
      %s223 = smul.addr %s220, 4
      %s224 = sadd.s32 %s222, %s223
      %s225 = smul.addr %s224, 4
      %s226 = scalar_lea.vmem %s2, %s225
      %p227 = pneg %p112
      %p228 = pneg %p109
      %p229 = pneg %p140
      %p230 = pneg %p137
      %p231 = scmp.lt.s32.totalorder %s19, 1
      %s232 = scalar_select %p231, %s19, 1
      %p233 = scmp.lt.s32.totalorder %s20, 0
      %s234 = scalar_select %p233, %s20, 0
      %s235 = smul.addr %s232, 4
      %s236 = sadd.s32 %s234, %s235
      %s237 = smul.addr %s236, 4
      %s238 = scalar_lea.vmem %s3, %s237
      %p239 = scmp.lt.s32.totalorder %s19, 1
      %s240 = scalar_select %p239, %s19, 1
      %p241 = scmp.lt.s32.totalorder %s20, 0
      %s242 = scalar_select %p241, %s20, 0
      %s243 = smul.addr %s240, 4
      %s244 = sadd.s32 %s242, %s243
      %s245 = smul.addr %s244, 4
      %s246 = scalar_lea.vmem %s0, %s245
      %p247 = scmp.lt.s32.totalorder %s19, 1
      %s248 = scalar_select %p247, %s19, 1
      %p249 = scmp.lt.s32.totalorder %s21, 0
      %s250 = scalar_select %p249, %s21, 0
      %s251 = smul.addr %s248, 4
      %s252 = sadd.s32 %s250, %s251
      %s253 = smul.addr %s252, 4
      %s254 = scalar_lea.vmem %s1, %s253
      %p255 = scmp.lt.s32.totalorder %s19, 1
      %s256 = scalar_select %p255, %s19, 1
      %p257 = scmp.lt.s32.totalorder %s21, 0
      %s258 = scalar_select %p257, %s21, 0
      %s259 = smul.addr %s256, 4
      %s260 = sadd.s32 %s258, %s259
      %s261 = smul.addr %s260, 4
      %s262 = scalar_lea.vmem %s2, %s261
      %p263 = scmp.lt.s32.totalorder %s19, 1
      %s264 = scalar_select %p263, %s19, 1
      %p265 = scmp.lt.s32.totalorder %s20, 0
      %s266 = scalar_select %p265, %s20, 0
      %s267 = smul.addr %s264, 4
      %s268 = sadd.s32 %s266, %s267
      %s269 = smul.addr %s268, 4
      %s270 = scalar_lea.vmem %s3, %s269
      %p272 = scmp.eq.s32.totalorder %s21, 0
      // Predicated region
      $region33: #{tess_transformer_forward.11} parent=31 // pred_check
        %p273 = pneg %p272
      $region34: #{tess_transformer_forward.11} parent=31 // pred_check_branch
        %275 = sbr.rel (%p273) target = $region36
      $region35: #{tess_transformer_forward.11} parent=31 // pred_region
        %vm276 = vcmask 60416
        %277 = vst.msk [vmem:[#allocation2] sm:$0xf] %vm276, -inf
        %278 = vst.msk [vmem:[#allocation3] sm:$0xf] %vm276, 0.0
        %vm279 = vcmask 64512
        %280 = vst.msk [vmem:[#allocation4] sm:$0xff] %vm279, 0.0
        %281 = vst.msk [vmem:[#allocation4 + $0x8] sm:$0xff] %vm279, 0.0
        %282 = vst.msk [vmem:[#allocation4 + $0x10] sm:$0xff] %vm279, 0.0
        %283 = vst.msk [vmem:[#allocation4 + $0x18] sm:$0xff] %vm279, 0.0
      $region36: #{tess_transformer_forward.11} parent=31 // pred_fallthru
        _
      %v284 = vld [vmem:[%s246] sm:$0xf]
      %v285 = vld [vmem:[%s246 + $0x4] sm:$0xf]
      %v286 = vld [vmem:[%s246 + $0x8] sm:$0xf]
      %v287 = vld [vmem:[%s246 + $0xc] sm:$0xf]
      %v288 = vld [vmem:[%s254] sm:$0xf]
      %v289 = vld [vmem:[%s254 + $0x4] sm:$0xf]
      %v290 = vld [vmem:[%s254 + $0x8] sm:$0xf]
      %v291 = vld [vmem:[%s254 + $0xc] sm:$0xf]
      %v292 = vld [vmem:[%s262] sm:$0xf]
      %v293 = vld [vmem:[%s262 + $0x4] sm:$0xf]
      %v294 = vld [vmem:[%s262 + $0x8] sm:$0xf]
      %v295 = vld [vmem:[%s262 + $0xc] sm:$0xf]
      %vm296 = vcmask 64512
      %v298 = vsel %vm296, %v284, 0
      %v301 = vsel %vm296, %v288, 0
      %303 = vmatpush.bf16.xpose.msra.mxu0 0
      %304 = vmatpush.bf16.xpose.msra.mxu0 0
      %305 = vmatpush.bf16.xpose.msra.mxu0 0
      %306 = vmatpush.bf16.xpose.msra.mxu0 0
      %307 = vmatpush.bf16.xpose.msra.mxu0 0
      %308 = vmatpush.bf16.xpose.msra.mxu0 0
      %309 = vmatpush.bf16.xpose.msra.mxu0 0
      %310 = vmatpush.bf16.xpose.msra.mxu0 %v301
      %311 = vmatmul.bf16.gmra.mxu0 %v298
      %v312 = vpop.f32.mrf.mxu0
      %v313 = vadd.f32 0.0, %v312
      %v314 = vpop.f32.mrf.mxu0
      %315 = vdwg.mxu0
      %v317 = vsel %vm296, %v285, 0
      %v320 = vsel %vm296, %v289, 0
      %322 = vmatpush.bf16.xpose.msra.mxu0 0
      %323 = vmatpush.bf16.xpose.msra.mxu0 0
      %324 = vmatpush.bf16.xpose.msra.mxu0 0
      %325 = vmatpush.bf16.xpose.msra.mxu0 0
      %326 = vmatpush.bf16.xpose.msra.mxu0 0
      %327 = vmatpush.bf16.xpose.msra.mxu0 0
      %328 = vmatpush.bf16.xpose.msra.mxu0 0
      %329 = vmatpush.bf16.xpose.msra.mxu0 %v320
      %330 = vmatmul.bf16.gmra.mxu0 %v317
      %v331 = vpop.f32.mrf.mxu0
      %v332 = vadd.f32 0.0, %v331
      %v333 = vpop.f32.mrf.mxu0
      %334 = vdwg.mxu0
      %v336 = vsel %vm296, %v286, 0
      %v339 = vsel %vm296, %v290, 0
      %341 = vmatpush.bf16.xpose.msra.mxu0 0
      %342 = vmatpush.bf16.xpose.msra.mxu0 0
      %343 = vmatpush.bf16.xpose.msra.mxu0 0
      %344 = vmatpush.bf16.xpose.msra.mxu0 0
      %345 = vmatpush.bf16.xpose.msra.mxu0 0
      %346 = vmatpush.bf16.xpose.msra.mxu0 0
      %347 = vmatpush.bf16.xpose.msra.mxu0 0
      %348 = vmatpush.bf16.xpose.msra.mxu0 %v339
      %349 = vmatmul.bf16.gmra.mxu0 %v336
      %v350 = vpop.f32.mrf.mxu0
      %v351 = vadd.f32 0.0, %v350
      %v352 = vpop.f32.mrf.mxu0
      %353 = vdwg.mxu0
      %v355 = vsel %vm296, %v287, 0
      %v358 = vsel %vm296, %v291, 0
      %360 = vmatpush.bf16.xpose.msra.mxu0 0
      %361 = vmatpush.bf16.xpose.msra.mxu0 0
      %362 = vmatpush.bf16.xpose.msra.mxu0 0
      %363 = vmatpush.bf16.xpose.msra.mxu0 0
      %364 = vmatpush.bf16.xpose.msra.mxu0 0
      %365 = vmatpush.bf16.xpose.msra.mxu0 0
      %366 = vmatpush.bf16.xpose.msra.mxu0 0
      %367 = vmatpush.bf16.xpose.msra.mxu0 %v358
      %368 = vmatmul.bf16.gmra.mxu0 %v355
      %v369 = vpop.f32.mrf.mxu0
      %v370 = vadd.f32 0.0, %v369
      %v371 = vpop.f32.mrf.mxu0
      %372 = vdwg.mxu0
      %v373 = vld [vmem:[#allocation2] sm:$0xf]
      %v374 = vsel %vm296, %v313, -inf
      %375 = vmax.xlane.f32.xlu0 %v374
      %v376 = vpop.xlane.xlu0 %375
      %v377 = vsel %vm296, %v332, -inf
      %378 = vmax.xlane.f32.xlu0 %v377
      %v379 = vpop.xlane.xlu0 %378
      %v380 = vsel %vm296, %v351, -inf
      %381 = vmax.xlane.f32.xlu0 %v380
      %v382 = vpop.xlane.xlu0 %381
      %v383 = vsel %vm296, %v370, -inf
      %384 = vmax.xlane.f32.xlu0 %v383
      %v385 = vpop.xlane.xlu0 %384
      %v390 = vlaneseq
      %v391 = vand.u32 %v390, 127
      %v392 = vperm.slane %v376, %v391
      %v393 = vperm.slane %v379, %v391
      %v394 = vperm.slane %v382, %v391
      %v395 = vperm.slane %v385, %v391
      %vm396 = vcmask 1041409
      %v397 = vsel %vm396, %v393, %v392
      %vm398 = vcmask 1042434
      %v399 = vsel %vm398, %v394, %v397
      %vm400 = vcmask 1043459
      %v401 = vsel %vm400, %v395, %v399
      %v403 = vmax.f32 %v373, %v401
      %v404 = vsub.f32 %v373, %v403
      %v405 = vmul.f32 %v404, 1.442695
      %v406 = vpow.pop %v405
      %v407 = vperm.slane %v403, 0
      %v408 = vlaneseq
      %v409 = vshrl.u32 %v408, 7
      %411 = vset.pattern.permute.xlu0 %v409
      %412 = vperm.xlu0 %411, %v407
      %v413 = vpop.permute.xlu0 %412
      %v414 = vperm.slane %v403, 1
      %v415 = vlaneseq
      %v416 = vshrl.u32 %v415, 7
      %418 = vset.pattern.permute.xlu0 %v416
      %419 = vperm.xlu0 %418, %v414
      %v420 = vpop.permute.xlu0 %419
      %v421 = vperm.slane %v403, 2
      %v422 = vlaneseq
      %v423 = vshrl.u32 %v422, 7
      %425 = vset.pattern.permute.xlu0 %v423
      %426 = vperm.xlu0 %425, %v421
      %v427 = vpop.permute.xlu0 %426
      %v428 = vperm.slane %v403, 3
      %v429 = vlaneseq
      %v430 = vshrl.u32 %v429, 7
      %432 = vset.pattern.permute.xlu0 %v430
      %433 = vperm.xlu0 %432, %v428
      %v434 = vpop.permute.xlu0 %433
      %v435 = vsub.f32 %v313, %v413
      %v436 = vsub.f32 %v332, %v420
      %v437 = vsub.f32 %v351, %v427
      %v438 = vsub.f32 %v370, %v434
      %v439 = vmul.f32 %v435, 1.442695
      %v440 = vpow.pop %v439
      %v441 = vmul.f32 %v436, 1.442695
      %v442 = vpow.pop %v441
      %v443 = vmul.f32 %v437, 1.442695
      %v444 = vpow.pop %v443
      %v445 = vmul.f32 %v438, 1.442695
      %v446 = vpow.pop %v445
      %v447 = vld [vmem:[#allocation3] sm:$0xf]
      %v448 = vmul.f32 %v406, %v447
      %v449 = vsel %vm296, %v440, 0.0
      %450 = vadd.xlane.f32.xlu0 %v449
      %v451 = vpop.xlane.xlu0 %450
      %v452 = vsel %vm296, %v442, 0.0
      %453 = vadd.xlane.f32.xlu0 %v452
      %v454 = vpop.xlane.xlu0 %453
      %v455 = vsel %vm296, %v444, 0.0
      %456 = vadd.xlane.f32.xlu0 %v455
      %v457 = vpop.xlane.xlu0 %456
      %v458 = vsel %vm296, %v446, 0.0
      %459 = vadd.xlane.f32.xlu0 %v458
      %v460 = vpop.xlane.xlu0 %459
      %v465 = vperm.slane %v451, %v391
      %v466 = vperm.slane %v454, %v391
      %v467 = vperm.slane %v457, %v391
      %v468 = vperm.slane %v460, %v391
      %v469 = vsel %vm396, %v466, %v465
      %v470 = vsel %vm398, %v467, %v469
      %v471 = vsel %vm400, %v468, %v470
      %v473 = vadd.f32 %v448, %v471
      %vm474 = vcmask 60416
      %475 = vst.msk [vmem:[#allocation3] sm:$0xf] %vm474, %v473
      %v476 = vperm.slane %v406, 0
      %v477 = vlaneseq
      %v478 = vshrl.u32 %v477, 7
      %480 = vset.pattern.permute.xlu0 %v478
      %481 = vperm.xlu0 %480, %v476
      %v482 = vpop.permute.xlu0 %481
      %v483 = vperm.slane %v406, 1
      %v484 = vlaneseq
      %v485 = vshrl.u32 %v484, 7
      %487 = vset.pattern.permute.xlu0 %v485
      %488 = vperm.xlu0 %487, %v483
      %v489 = vpop.permute.xlu0 %488
      %v490 = vperm.slane %v406, 2
      %v491 = vlaneseq
      %v492 = vshrl.u32 %v491, 7
      %494 = vset.pattern.permute.xlu0 %v492
      %495 = vperm.xlu0 %494, %v490
      %v496 = vpop.permute.xlu0 %495
      %v497 = vperm.slane %v406, 3
      %v498 = vlaneseq
      %v499 = vshrl.u32 %v498, 7
      %501 = vset.pattern.permute.xlu0 %v499
      %502 = vperm.xlu0 %501, %v497
      %v503 = vpop.permute.xlu0 %502
      %v504 = vld [vmem:[#allocation4] sm:$0xff]
      %v505 = vld [vmem:[#allocation4 + $0x8] sm:$0xff]
      %v506 = vld [vmem:[#allocation4 + $0x10] sm:$0xff]
      %v507 = vld [vmem:[#allocation4 + $0x18] sm:$0xff]
      %v508 = vmul.f32 %v482, %v504
      %v509 = vmul.f32 %v489, %v505
      %v510 = vmul.f32 %v496, %v506
      %v511 = vmul.f32 %v503, %v507
      %v512 = vpack.c.bf16 %v440, %v440
      %v513 = vpack.c.bf16 %v442, %v442
      %v514 = vpack.c.bf16 %v444, %v444
      %v515 = vpack.c.bf16 %v446, %v446
      %v517 = vsel %vm296, %v512, 0
      %vm519 = vcmask 1043456
      %v521 = vsel %vm519, %v292, 0
      %523 = vmatpush.bf16.msra.mxu0 0
      %524 = vmatpush.bf16.msra.mxu0 0
      %525 = vmatpush.bf16.msra.mxu0 0
      %526 = vmatpush.bf16.msra.mxu0 0
      %527 = vmatpush.bf16.msra.mxu0 0
      %528 = vmatpush.bf16.msra.mxu0 0
      %529 = vmatpush.bf16.msra.mxu0 0
      %530 = vmatpush.bf16.msra.mxu0 %v521
      %531 = vmatmul.bf16.gmra.mxu0 %v517
      %v532 = vpop.f32.mrf.mxu0
      %v533 = vadd.f32 0.0, %v532
      %v534 = vpop.f32.mrf.mxu0
      %535 = vdwg.mxu0
      %v537 = vsel %vm296, %v513, 0
      %v540 = vsel %vm519, %v293, 0
      %542 = vmatpush.bf16.msra.mxu0 0
      %543 = vmatpush.bf16.msra.mxu0 0
      %544 = vmatpush.bf16.msra.mxu0 0
      %545 = vmatpush.bf16.msra.mxu0 0
      %546 = vmatpush.bf16.msra.mxu0 0
      %547 = vmatpush.bf16.msra.mxu0 0
      %548 = vmatpush.bf16.msra.mxu0 0
      %549 = vmatpush.bf16.msra.mxu0 %v540
      %550 = vmatmul.bf16.gmra.mxu0 %v537
      %v551 = vpop.f32.mrf.mxu0
      %v552 = vadd.f32 0.0, %v551
      %v553 = vpop.f32.mrf.mxu0
      %554 = vdwg.mxu0
      %v556 = vsel %vm296, %v514, 0
      %v559 = vsel %vm519, %v294, 0
      %561 = vmatpush.bf16.msra.mxu0 0
      %562 = vmatpush.bf16.msra.mxu0 0
      %563 = vmatpush.bf16.msra.mxu0 0
      %564 = vmatpush.bf16.msra.mxu0 0
      %565 = vmatpush.bf16.msra.mxu0 0
      %566 = vmatpush.bf16.msra.mxu0 0
      %567 = vmatpush.bf16.msra.mxu0 0
      %568 = vmatpush.bf16.msra.mxu0 %v559
      %569 = vmatmul.bf16.gmra.mxu0 %v556
      %v570 = vpop.f32.mrf.mxu0
      %v571 = vadd.f32 0.0, %v570
      %v572 = vpop.f32.mrf.mxu0
      %573 = vdwg.mxu0
      %v575 = vsel %vm296, %v515, 0
      %v578 = vsel %vm519, %v295, 0
      %580 = vmatpush.bf16.msra.mxu0 0
      %581 = vmatpush.bf16.msra.mxu0 0
      %582 = vmatpush.bf16.msra.mxu0 0
      %583 = vmatpush.bf16.msra.mxu0 0
      %584 = vmatpush.bf16.msra.mxu0 0
      %585 = vmatpush.bf16.msra.mxu0 0
      %586 = vmatpush.bf16.msra.mxu0 0
      %587 = vmatpush.bf16.msra.mxu0 %v578
      %588 = vmatmul.bf16.gmra.mxu0 %v575
      %v589 = vpop.f32.mrf.mxu0
      %v590 = vadd.f32 0.0, %v589
      %v591 = vpop.f32.mrf.mxu0
      %592 = vdwg.mxu0
      %v593 = vadd.f32 %v508, %v533
      %v594 = vadd.f32 %v509, %v552
      %v595 = vadd.f32 %v510, %v571
      %v596 = vadd.f32 %v511, %v590
      %597 = vst.msk [vmem:[#allocation4] sm:$0xff] %vm296, %v593
      %598 = vst.msk [vmem:[#allocation4 + $0x8] sm:$0xff] %vm296, %v594
      %599 = vst.msk [vmem:[#allocation4 + $0x10] sm:$0xff] %vm296, %v595
      %600 = vst.msk [vmem:[#allocation4 + $0x18] sm:$0xff] %vm296, %v596
      %601 = vst.msk [vmem:[#allocation2] sm:$0xf] %vm474, %v403
      // Predicated region
      $region37: #{tess_transformer_forward.11} parent=31 // pred_check
        %p602 = pneg %p272
      $region38: #{tess_transformer_forward.11} parent=31 // pred_check_branch
        %604 = sbr.rel (%p602) target = $region40
      $region39: #{tess_transformer_forward.11} parent=31 // pred_region
        %v605 = vld [vmem:[#allocation3] sm:$0xf]
        %v606 = vrcp.pop %v605
        %v607 = vld [vmem:[#allocation4] sm:$0xff]
        %v608 = vld [vmem:[#allocation4 + $0x8] sm:$0xff]
        %v609 = vld [vmem:[#allocation4 + $0x10] sm:$0xff]
        %v610 = vld [vmem:[#allocation4 + $0x18] sm:$0xff]
        %v611 = vperm.slane %v606, 0
        %v612 = vlaneseq
        %v613 = vshrl.u32 %v612, 7
        %615 = vset.pattern.permute.xlu0 %v613
        %616 = vperm.xlu0 %615, %v611
        %v617 = vpop.permute.xlu0 %616
        %v618 = vperm.slane %v606, 1
        %v619 = vlaneseq
        %v620 = vshrl.u32 %v619, 7
        %622 = vset.pattern.permute.xlu0 %v620
        %623 = vperm.xlu0 %622, %v618
        %v624 = vpop.permute.xlu0 %623
        %v625 = vperm.slane %v606, 2
        %v626 = vlaneseq
        %v627 = vshrl.u32 %v626, 7
        %629 = vset.pattern.permute.xlu0 %v627
        %630 = vperm.xlu0 %629, %v625
        %v631 = vpop.permute.xlu0 %630
        %v632 = vperm.slane %v606, 3
        %v633 = vlaneseq
        %v634 = vshrl.u32 %v633, 7
        %636 = vset.pattern.permute.xlu0 %v634
        %637 = vperm.xlu0 %636, %v632
        %v638 = vpop.permute.xlu0 %637
        %v639 = vmul.f32 %v607, %v617
        %v640 = vmul.f32 %v608, %v624
        %v641 = vmul.f32 %v609, %v631
        %v642 = vmul.f32 %v610, %v638
        %v643 = vpack.c.bf16 %v639, %v639
        %v644 = vpack.c.bf16 %v640, %v640
        %v645 = vpack.c.bf16 %v641, %v641
        %v646 = vpack.c.bf16 %v642, %v642
        %647 = vst.msk [vmem:[%s270] sm:$0xf] %vm474, %v643
        %648 = vst.msk [vmem:[%s270 + $0x4] sm:$0xf] %vm474, %v644
        %649 = vst.msk [vmem:[%s270 + $0x8] sm:$0xf] %vm474, %v645
        %650 = vst.msk [vmem:[%s270 + $0xc] sm:$0xf] %vm474, %v646
      $region40: #{tess_transformer_forward.11} parent=31 // pred_fallthru
        _
      %p651 = scmp.lt.s32.totalorder %s19, 1
      %s652 = scalar_select %p651, %s19, 1
      %p653 = scmp.lt.s32.totalorder %s20, 0
      %s654 = scalar_select %p653, %s20, 0
      %s655 = smul.addr %s652, 4
      %s656 = sadd.s32 %s654, %s655
      %s657 = smul.addr %s656, 4
      %s658 = scalar_lea.vmem %s3, %s657
      // Predicated region
      $region41: #{tess_transformer_forward.11} parent=31 // pred_check
        %p659 = pneg %p137
      $region42: #{tess_transformer_forward.11} parent=31 // pred_check_branch
        %661 = sbr.rel (%p659) target = $region44
      $region43: #{tess_transformer_forward.11} parent=31 // pred_region
        _
      $region44: #{tess_transformer_forward.11} parent=31 // pred_fallthru
        _
    $region32: #{tess_transformer_forward.11} parent=5 // pred_fallthru
      _
    %p662 = scmp.le.s32.totalorder 2, %s9
    // Predicated region
    $region45: #{tess_transformer_forward.11} parent=5 // pred_check
      %p663 = pneg %p662
    $region46: #{tess_transformer_forward.11} parent=5 // pred_check_branch
      %665 = sbr.rel (%p663) target = $region48
    $region47: #{tess_transformer_forward.11} parent=5 // pred_region
      %s666 = ssub.s32 %s9, 2
      // Predicated region
      $region49: #{tess_transformer_forward.11} parent=47 // pred_check
        %p667 = pneg %p143
      $region50: #{tess_transformer_forward.11} parent=47 // pred_check_branch
        %669 = sbr.rel (%p667) target = $region52
      $region51: #{tess_transformer_forward.11} parent=47 // pred_region
        %p670 = scmp.lt.s32.totalorder %s22, 1
        %s671 = scalar_select %p670, %s22, 1
        %p672 = scmp.lt.s32.totalorder %s23, 0
        %s673 = scalar_select %p672, %s23, 0
        %s674 = smul.addr %s671, 4
        %s675 = sadd.s32 %s673, %s674
        %s676 = smul.addr %s675, 4
        %s677 = scalar_lea.vmem %s3, %s676
      $region52: #{tess_transformer_forward.11} parent=47 // pred_fallthru
        _
    $region48: #{tess_transformer_forward.11} parent=5 // pred_fallthru
      _
  $region6: #{tess_transformer_forward.11} parent=0 // loop_footer
    %s13 = sadd.s32 1, %s9
  $region7: #{tess_transformer_forward.11} parent=0 // loop_footer_branch
    %8 = sbr.rel target = $region3
  $region8: #{tess_transformer_forward.11} parent=0 // loop_exit
    _

// kernel: tess_transformer_forward.12
$region0: #{tess_transformer_forward.12}
  #allocation0 [shape = 'u32[]', space=smem, size = 0x4, offset = 0x4, fixed_abs, tag = 'smem constant byte address 0x4 - core index']
  #allocation1 [shape = 'u32[72,128]{1,0:T(1,128)}', space=vmem, size = 0x9000, scoped, tag = 'internal scratch']
  #allocation2 [shape = 'f32[8,32]{1,0:T(8,128)}', space=vmem, size = 0x1000, scoped, tag = 'scratch operand']
  %s0 = inlined_call_operand.vmem [shape: bf16[2,4,8,8], index: 0, kind: input, shape index: {}]
  %s1 = inlined_call_operand.vmem [shape: bf16[4,8,32], index: 1, kind: input, shape index: {}]
  %s2 = inlined_call_operand.vmem [shape: f32[1,32], index: 2, kind: input, shape index: {}]
  %s3 = inlined_call_operand.vmem [shape: bf16[2,8,32], index: 3, kind: input, shape index: {}]
  %s4 = inlined_call_operand.vmem [shape: f32[1,32], index: 4, kind: input, shape index: {}]
  %s5 = inlined_call_operand.vmem [shape: f32[1,32], index: 5, kind: input, shape index: {}]
  %s6 = inlined_call_operand.vmem [shape: bf16[2,8,32], index: 6, kind: output, shape index: {}]
  %s7 = sld [smem:[#allocation0]]
  $region69: #{tess_transformer_forward.12} parent=0
    _
  %s9 = ssub.s32 1, %s7
  %s10 = scalar_select 0, %s9, %s7
  loop: start=0, step=1, limit=10
  $region2: #{tess_transformer_forward.12} parent=0 // loop_pre_header
    _
  $region3: #{tess_transformer_forward.12} parent=0 // loop_header
    %s12 = sphi 0, %s16
    %p13 = scmp.ge.s32.totalorder %s12, 10
    %s19 = sphi 0, %s38
    %s20 = sphi 0, %s34
    %s21 = sphi 0, %s30
    %s22 = sphi 0, %s19
    %s23 = sphi 0, %s20
    %s24 = sphi 0, %s21
    %s25 = sphi 0, %s22
    %s26 = sphi 0, %s23
    %s27 = sphi 0, %s24
    %s45 = sphi 0, %s47
    %s48 = sphi 0, %s45
    %s49 = sphi 0, %s48
    %s65 = sphi 0, %s49
    %s71 = sphi 0, %s73
    %s74 = sphi 0, %s71
    %s75 = sphi 0, %s74
    %s91 = sphi 0, %s75
    %s95 = sphi 0, %s95
    %s97 = sphi 0, %s95
    %s98 = sphi 0, %s97
    %s112 = sphi 0, %s98
    %s120 = sphi 0, %s122
    %s123 = sphi 0, %s120
    %s124 = sphi 0, %s123
    %s140 = sphi 0, %s124
    %s144 = sphi 0, %s144
    %s146 = sphi 0, %s144
    %s147 = sphi 0, %s146
    %s161 = sphi 0, %s147
    %s165 = sphi 0, %s165
    %s167 = sphi 0, %s165
    %s168 = sphi 0, %s167
    %s182 = sphi 0, %s168
    %s190 = sphi 0, %s192
    %s193 = sphi 0, %s190
    %s194 = sphi 0, %s193
    %s210 = sphi 0, %s194
  $region4: #{tess_transformer_forward.12} parent=0 // loop_header_branch
    %15 = sbr.rel (%p13) target = $region8
  $region5: #{tess_transformer_forward.12} parent=0 // loop_body
    %s17 = ssub.s32 %s12, 1
    %s18 = ssub.s32 %s12, 2
    %s28 = sadd.s32 1, %s21
    %p29 = scmp.ge.s32.totalorder %s28, 4
    %s30 = scalar_select %p29, 0, %s28
    %s31 = sadd.s32 1, %s20
    %s32 = scalar_select %p29, %s31, %s20
    %p33 = scmp.ge.s32.totalorder %s32, 1
    %s34 = scalar_select %p33, 0, %s32
    %s35 = sadd.s32 1, %s19
    %s36 = scalar_select %p33, %s35, %s19
    %p37 = scmp.ge.s32.totalorder %s36, 2
    %s38 = scalar_select %p37, 0, %s36
    %s39 = ssub.s32 %s19, %s38
    %s40 = ssub.s32 %s21, %s30
    %s41 = sor.u32 %s39, %s40
    %s42 = ssub.s32 %s20, %s34
    %s43 = sor.u32 %s41, %s42
    %p44 = scmp.eq.s32.totalorder %s43, 0
    %s46 = sadd.s32 %s45, 1
    %s47 = scalar_select %p44, %s45, %s46
    %p50 = pneg %p44
    %p51 = scmp.eq.s32.totalorder %s12, 7
    %p52 = por %p50, %p51
    %p53 = scmp.ne.s32.totalorder %s45, %s48
    %p54 = scmp.eq.s32.totalorder %s12, 0
    %p55 = por %p53, %p54
    %p56 = scmp.ne.s32.totalorder %s45, %s48
    %p57 = scmp.eq.s32.totalorder %s17, 7
    %p58 = por %p56, %p57
    %p59 = scmp.ne.s32.totalorder %s48, %s49
    %p60 = scmp.eq.s32.totalorder %s17, 0
    %p61 = por %p59, %p60
    %p62 = scmp.ne.s32.totalorder %s48, %s49
    %p63 = scmp.eq.s32.totalorder %s18, 7
    %p64 = por %p62, %p63
    %p66 = scmp.ne.s32.totalorder %s49, %s65
    %p67 = scmp.eq.s32.totalorder %s18, 0
    %p68 = por %p66, %p67
    %s69 = ssub.s32 %s21, %s30
    %p70 = scmp.eq.s32.totalorder %s69, 0
    %s72 = sadd.s32 %s71, 1
    %s73 = scalar_select %p70, %s71, %s72
    %p76 = pneg %p70
    %p77 = scmp.eq.s32.totalorder %s12, 7
    %p78 = por %p76, %p77
    %p79 = scmp.ne.s32.totalorder %s71, %s74
    %p80 = scmp.eq.s32.totalorder %s12, 0
    %p81 = por %p79, %p80
    %p82 = scmp.ne.s32.totalorder %s71, %s74
    %p83 = scmp.eq.s32.totalorder %s17, 7
    %p84 = por %p82, %p83
    %p85 = scmp.ne.s32.totalorder %s74, %s75
    %p86 = scmp.eq.s32.totalorder %s17, 0
    %p87 = por %p85, %p86
    %p88 = scmp.ne.s32.totalorder %s74, %s75
    %p89 = scmp.eq.s32.totalorder %s18, 7
    %p90 = por %p88, %p89
    %p92 = scmp.ne.s32.totalorder %s75, %s91
    %p93 = scmp.eq.s32.totalorder %s18, 0
    %p94 = por %p92, %p93
    %s96 = sadd.s32 %s95, 1
    %p99 = scmp.eq.s32.totalorder %s12, 7
    %p100 = scmp.ne.s32.totalorder %s95, %s97
    %p101 = scmp.eq.s32.totalorder %s12, 0
    %p102 = por %p100, %p101
    %p103 = scmp.ne.s32.totalorder %s95, %s97
    %p104 = scmp.eq.s32.totalorder %s17, 7
    %p105 = por %p103, %p104
    %p106 = scmp.ne.s32.totalorder %s97, %s98
    %p107 = scmp.eq.s32.totalorder %s17, 0
    %p108 = por %p106, %p107
    %p109 = scmp.ne.s32.totalorder %s97, %s98
    %p110 = scmp.eq.s32.totalorder %s18, 7
    %p111 = por %p109, %p110
    %p113 = scmp.ne.s32.totalorder %s98, %s112
    %p114 = scmp.eq.s32.totalorder %s18, 0
    %p115 = por %p113, %p114
    %s116 = ssub.s32 %s19, %s38
    %s117 = ssub.s32 %s20, %s34
    %s118 = sor.u32 %s116, %s117
    %p119 = scmp.eq.s32.totalorder %s118, 0
    %s121 = sadd.s32 %s120, 1
    %s122 = scalar_select %p119, %s120, %s121
    %p125 = pneg %p119
    %p126 = scmp.eq.s32.totalorder %s12, 7
    %p127 = por %p125, %p126
    %p128 = scmp.ne.s32.totalorder %s120, %s123
    %p129 = scmp.eq.s32.totalorder %s12, 0
    %p130 = por %p128, %p129
    %p131 = scmp.ne.s32.totalorder %s120, %s123
    %p132 = scmp.eq.s32.totalorder %s17, 7
    %p133 = por %p131, %p132
    %p134 = scmp.ne.s32.totalorder %s123, %s124
    %p135 = scmp.eq.s32.totalorder %s17, 0
    %p136 = por %p134, %p135
    %p137 = scmp.ne.s32.totalorder %s123, %s124
    %p138 = scmp.eq.s32.totalorder %s18, 7
    %p139 = por %p137, %p138
    %p141 = scmp.ne.s32.totalorder %s124, %s140
    %p142 = scmp.eq.s32.totalorder %s18, 0
    %p143 = por %p141, %p142
    %s145 = sadd.s32 %s144, 1
    %p148 = scmp.eq.s32.totalorder %s12, 7
    %p149 = scmp.ne.s32.totalorder %s144, %s146
    %p150 = scmp.eq.s32.totalorder %s12, 0
    %p151 = por %p149, %p150
    %p152 = scmp.ne.s32.totalorder %s144, %s146
    %p153 = scmp.eq.s32.totalorder %s17, 7
    %p154 = por %p152, %p153
    %p155 = scmp.ne.s32.totalorder %s146, %s147
    %p156 = scmp.eq.s32.totalorder %s17, 0
    %p157 = por %p155, %p156
    %p158 = scmp.ne.s32.totalorder %s146, %s147
    %p159 = scmp.eq.s32.totalorder %s18, 7
    %p160 = por %p158, %p159
    %p162 = scmp.ne.s32.totalorder %s147, %s161
    %p163 = scmp.eq.s32.totalorder %s18, 0
    %p164 = por %p162, %p163
    %s166 = sadd.s32 %s165, 1
    %p169 = scmp.eq.s32.totalorder %s12, 7
    %p170 = scmp.ne.s32.totalorder %s165, %s167
    %p171 = scmp.eq.s32.totalorder %s12, 0
    %p172 = por %p170, %p171
    %p173 = scmp.ne.s32.totalorder %s165, %s167
    %p174 = scmp.eq.s32.totalorder %s17, 7
    %p175 = por %p173, %p174
    %p176 = scmp.ne.s32.totalorder %s167, %s168
    %p177 = scmp.eq.s32.totalorder %s17, 0
    %p178 = por %p176, %p177
    %p179 = scmp.ne.s32.totalorder %s167, %s168
    %p180 = scmp.eq.s32.totalorder %s18, 7
    %p181 = por %p179, %p180
    %p183 = scmp.ne.s32.totalorder %s168, %s182
    %p184 = scmp.eq.s32.totalorder %s18, 0
    %p185 = por %p183, %p184
    %s186 = ssub.s32 %s19, %s38
    %s187 = ssub.s32 %s20, %s34
    %s188 = sor.u32 %s186, %s187
    %p189 = scmp.eq.s32.totalorder %s188, 0
    %s191 = sadd.s32 %s190, 1
    %s192 = scalar_select %p189, %s190, %s191
    %p195 = pneg %p189
    %p196 = scmp.eq.s32.totalorder %s12, 7
    %p197 = por %p195, %p196
    %p198 = scmp.ne.s32.totalorder %s190, %s193
    %p199 = scmp.eq.s32.totalorder %s12, 0
    %p200 = por %p198, %p199
    %p201 = scmp.ne.s32.totalorder %s190, %s193
    %p202 = scmp.eq.s32.totalorder %s17, 7
    %p203 = por %p201, %p202
    %p204 = scmp.ne.s32.totalorder %s193, %s194
    %p205 = scmp.eq.s32.totalorder %s17, 0
    %p206 = por %p204, %p205
    %p207 = scmp.ne.s32.totalorder %s193, %s194
    %p208 = scmp.eq.s32.totalorder %s18, 7
    %p209 = por %p207, %p208
    %p211 = scmp.ne.s32.totalorder %s194, %s210
    %p212 = scmp.eq.s32.totalorder %s18, 0
    %p213 = por %p211, %p212
    %p214 = scmp.le.s32.totalorder 1, %s12
    %p215 = scmp.lt.s32.totalorder %s12, 9
    %p216 = pnand %p214, %p215
    %p217 = pneg %p216
    // Predicated region
    $region9: #{tess_transformer_forward.12} parent=5 // pred_check
      _
    $region10: #{tess_transformer_forward.12} parent=5 // pred_check_branch
      %219 = sbr.rel (%p216) target = $region12
    $region11: #{tess_transformer_forward.12} parent=5 // pred_region
      %s220 = ssub.s32 %s12, 1
      // Predicated region
      $region13: #{tess_transformer_forward.12} parent=11 // pred_check
        %p221 = pneg %p108
      $region14: #{tess_transformer_forward.12} parent=11 // pred_check_branch
        %223 = sbr.rel (%p221) target = $region16
      $region15: #{tess_transformer_forward.12} parent=11 // pred_region
        _
      $region16: #{tess_transformer_forward.12} parent=11 // pred_fallthru
        _
      // Predicated region
      $region17: #{tess_transformer_forward.12} parent=11 // pred_check
        %p224 = pneg %p157
      $region18: #{tess_transformer_forward.12} parent=11 // pred_check_branch
        %226 = sbr.rel (%p224) target = $region20
      $region19: #{tess_transformer_forward.12} parent=11 // pred_region
        _
      $region20: #{tess_transformer_forward.12} parent=11 // pred_fallthru
        _
      // Predicated region
      $region21: #{tess_transformer_forward.12} parent=11 // pred_check
        %p227 = pneg %p178
      $region22: #{tess_transformer_forward.12} parent=11 // pred_check_branch
        %229 = sbr.rel (%p227) target = $region24
      $region23: #{tess_transformer_forward.12} parent=11 // pred_region
        _
      $region24: #{tess_transformer_forward.12} parent=11 // pred_fallthru
        _
    $region12: #{tess_transformer_forward.12} parent=5 // pred_fallthru
      _
    %p230 = scmp.lt.s32.totalorder %s12, 8
    // Predicated region
    $region25: #{tess_transformer_forward.12} parent=5 // pred_check
      %p231 = pneg %p230
    $region26: #{tess_transformer_forward.12} parent=5 // pred_check_branch
      %233 = sbr.rel (%p231) target = $region28
    $region27: #{tess_transformer_forward.12} parent=5 // pred_region
      // Predicated region
      $region29: #{tess_transformer_forward.12} parent=27 // pred_check
        %p234 = pneg %p55
      $region30: #{tess_transformer_forward.12} parent=27 // pred_check_branch
        %236 = sbr.rel (%p234) target = $region32
      $region31: #{tess_transformer_forward.12} parent=27 // pred_region
        %p237 = scmp.lt.s32.totalorder %s19, 1
        %s238 = scalar_select %p237, %s19, 1
        %p239 = scmp.lt.s32.totalorder %s21, 3
        %s240 = scalar_select %p239, %s21, 3
        %p241 = scmp.lt.s32.totalorder %s20, 0
        %s242 = scalar_select %p241, %s20, 0
        %s243 = sadd.s32 %s242, %s240
        %s244 = smul.addr %s238, 4
        %s245 = sadd.s32 %s243, %s244
        %s246 = smul.addr %s245, 4
        %s247 = scalar_lea.vmem %s0, %s246
      $region32: #{tess_transformer_forward.12} parent=27 // pred_fallthru
        _
      // Predicated region
      $region33: #{tess_transformer_forward.12} parent=27 // pred_check
        %p248 = pneg %p81
      $region34: #{tess_transformer_forward.12} parent=27 // pred_check_branch
        %250 = sbr.rel (%p248) target = $region36
      $region35: #{tess_transformer_forward.12} parent=27 // pred_region
        %p251 = scmp.lt.s32.totalorder %s21, 3
        %s252 = scalar_select %p251, %s21, 3
        %s253 = smul.addr %s252, 4
        %s254 = scalar_lea.vmem %s1, %s253
      $region36: #{tess_transformer_forward.12} parent=27 // pred_fallthru
        _
      // Predicated region
      $region37: #{tess_transformer_forward.12} parent=27 // pred_check
        %p255 = pneg %p130
      $region38: #{tess_transformer_forward.12} parent=27 // pred_check_branch
        %257 = sbr.rel (%p255) target = $region40
      $region39: #{tess_transformer_forward.12} parent=27 // pred_region
        %p258 = scmp.lt.s32.totalorder %s19, 1
        %s259 = scalar_select %p258, %s19, 1
        %p260 = scmp.lt.s32.totalorder %s20, 0
        %s261 = scalar_select %p260, %s20, 0
        %s262 = sadd.s32 %s261, %s259
        %s263 = smul.addr %s262, 4
        %s264 = scalar_lea.vmem %s3, %s263
      $region40: #{tess_transformer_forward.12} parent=27 // pred_fallthru
        _
    $region28: #{tess_transformer_forward.12} parent=5 // pred_fallthru
      _
    %p265 = scmp.le.s32.totalorder 1, %s12
    %p266 = scmp.lt.s32.totalorder %s12, 9
    %p267 = pnand %p265, %p266
    %p268 = pneg %p267
    // Predicated region
    $region41: #{tess_transformer_forward.12} parent=5 // pred_check
      _
    $region42: #{tess_transformer_forward.12} parent=5 // pred_check_branch
      %270 = sbr.rel (%p267) target = $region44
    $region43: #{tess_transformer_forward.12} parent=5 // pred_region
      %s271 = ssub.s32 %s12, 1
      %p272 = scmp.lt.s32.totalorder %s22, 1
      %s273 = scalar_select %p272, %s22, 1
      %p274 = scmp.lt.s32.totalorder %s24, 3
      %s275 = scalar_select %p274, %s24, 3
      %p276 = scmp.lt.s32.totalorder %s23, 0
      %s277 = scalar_select %p276, %s23, 0
      %s278 = sadd.s32 %s277, %s275
      %s279 = smul.addr %s273, 4
      %s280 = sadd.s32 %s278, %s279
      %s281 = smul.addr %s280, 4
      %s282 = scalar_lea.vmem %s0, %s281
      %p283 = pneg %p61
      %p284 = pneg %p58
      %p285 = scmp.lt.s32.totalorder %s24, 3
      %s286 = scalar_select %p285, %s24, 3
      %s287 = smul.addr %s286, 4
      %s288 = scalar_lea.vmem %s1, %s287
      %p289 = pneg %p87
      %p290 = pneg %p84
      %p291 = pneg %p108
      %p292 = pneg %p105
      %p293 = scmp.lt.s32.totalorder %s22, 1
      %s294 = scalar_select %p293, %s22, 1
      %p295 = scmp.lt.s32.totalorder %s23, 0
      %s296 = scalar_select %p295, %s23, 0
      %s297 = sadd.s32 %s296, %s294
      %s298 = smul.addr %s297, 4
      %s299 = scalar_lea.vmem %s3, %s298
      %p300 = pneg %p136
      %p301 = pneg %p133
      %p302 = pneg %p157
      %p303 = pneg %p154
      %p304 = pneg %p178
      %p305 = pneg %p175
      %p306 = pneg %p206
      %p307 = pneg %p203
      %p308 = scmp.lt.s32.totalorder %s22, 1
      %s309 = scalar_select %p308, %s22, 1
      %p310 = scmp.lt.s32.totalorder %s23, 0
      %s311 = scalar_select %p310, %s23, 0
      %s312 = sadd.s32 %s311, %s309
      %s313 = smul.addr %s312, 4
      %s314 = scalar_lea.vmem %s6, %s313
      %p315 = scmp.lt.s32.totalorder %s22, 1
      %s316 = scalar_select %p315, %s22, 1
      %p317 = scmp.lt.s32.totalorder %s24, 3
      %s318 = scalar_select %p317, %s24, 3
      %p319 = scmp.lt.s32.totalorder %s23, 0
      %s320 = scalar_select %p319, %s23, 0
      %s321 = sadd.s32 %s320, %s318
      %s322 = smul.addr %s316, 4
      %s323 = sadd.s32 %s321, %s322
      %s324 = smul.addr %s323, 4
      %s325 = scalar_lea.vmem %s0, %s324
      %p326 = scmp.lt.s32.totalorder %s24, 3
      %s327 = scalar_select %p326, %s24, 3
      %s328 = smul.addr %s327, 4
      %s329 = scalar_lea.vmem %s1, %s328
      %p330 = scmp.lt.s32.totalorder %s22, 1
      %s331 = scalar_select %p330, %s22, 1
      %p332 = scmp.lt.s32.totalorder %s23, 0
      %s333 = scalar_select %p332, %s23, 0
      %s334 = sadd.s32 %s333, %s331
      %s335 = smul.addr %s334, 4
      %s336 = scalar_lea.vmem %s3, %s335
      %p337 = scmp.lt.s32.totalorder %s22, 1
      %s338 = scalar_select %p337, %s22, 1
      %p339 = scmp.lt.s32.totalorder %s23, 0
      %s340 = scalar_select %p339, %s23, 0
      %s341 = sadd.s32 %s340, %s338
      %s342 = smul.addr %s341, 4
      %s343 = scalar_lea.vmem %s6, %s342
      %v345 = vld [vmem:[%s325] sm:$0xf]
      %v346 = vld [vmem:[%s329] sm:$0xf]
      %vm347 = vcmask 64512
      %v349 = vsel %vm347, %v345, 0
      %vm351 = vcmask 1043456
      %v353 = vsel %vm351, %v346, 0
      %355 = vmatpush.bf16.msra.mxu0 0
      %356 = vmatpush.bf16.msra.mxu0 0
      %357 = vmatpush.bf16.msra.mxu0 0
      %358 = vmatpush.bf16.msra.mxu0 0
      %359 = vmatpush.bf16.msra.mxu0 0
      %360 = vmatpush.bf16.msra.mxu0 0
      %361 = vmatpush.bf16.msra.mxu0 0
      %362 = vmatpush.bf16.msra.mxu0 %v353
      %363 = vmatmul.bf16.gmra.mxu0 %v349
      %v364 = vpop.f32.mrf.mxu0
      %v365 = vadd.f32 0.0, %v364
      %v366 = vpop.f32.mrf.mxu0
      %367 = vdwg.mxu0
      %p368 = scmp.eq.s32.totalorder %s24, 0
      // Predicated region
      $region45: #{tess_transformer_forward.12} parent=43 // pred_check
        %p369 = pneg %p368
      $region46: #{tess_transformer_forward.12} parent=43 // pred_check_branch
        %371 = sbr.rel (%p369) target = $region48
      $region47: #{tess_transformer_forward.12} parent=43 // pred_region
        %vm372 = vcmask 261120
        %373 = vst.msk [vmem:[#allocation2] sm:$0xff] %vm372, %v365
      $region48: #{tess_transformer_forward.12} parent=43 // pred_fallthru
        _
      %p374 = scmp.gt.s32.totalorder %s24, 0
      // Predicated region
      $region49: #{tess_transformer_forward.12} parent=43 // pred_check
        %p375 = pneg %p374
      $region50: #{tess_transformer_forward.12} parent=43 // pred_check_branch
        %377 = sbr.rel (%p375) target = $region52
      $region51: #{tess_transformer_forward.12} parent=43 // pred_region
        %v378 = vld [vmem:[#allocation2] sm:$0xff]
        %v379 = vadd.f32 %v378, %v365
        %vm380 = vcmask 261120
        %381 = vst.msk [vmem:[#allocation2] sm:$0xff] %vm380, %v379
      $region52: #{tess_transformer_forward.12} parent=43 // pred_fallthru
        _
      %p382 = scmp.eq.s32.totalorder %s24, 3
      // Predicated region
      $region53: #{tess_transformer_forward.12} parent=43 // pred_check
        %p383 = pneg %p382
      $region54: #{tess_transformer_forward.12} parent=43 // pred_check_branch
        %385 = sbr.rel (%p383) target = $region56
      $region55: #{tess_transformer_forward.12} parent=43 // pred_region
        %v386 = vld [vmem:[#allocation2] sm:$0xff]
        %v387 = vld [vmem:[%s2] sm:$0x1]
        %v389 = vperm.slane %v387, 0
        %v391 = vadd.f32 %v386, %v389
        %v392 = vld [vmem:[%s336] sm:$0xf]
        %v393 = vunpack.c.l.bf16 %v392
        %v394 = vadd.f32 %v391, %v393
        %v395 = vld [vmem:[%s4] sm:$0x1]
        %v396 = vld [vmem:[%s5] sm:$0x1]
        %vm397 = vcmask 261120
        %v398 = vsel %vm397, %v394, 0.0
        %399 = vadd.xlane.f32.xlu0 %v398
        %v400 = vpop.xlane.xlu0 %399
        %v401 = vrcp.pop 32.0
        %v402 = vmul.f32 32.0, %v401
        %v403 = vsub.f32 1.0, %v402
        %v404 = vmul.f32 %v401, %v403
        %v405 = vadd.f32 %v401, %v404
        %vm406 = vweird.f32 %v401
        %v407 = vsel %vm406, %v401, %v405
        %v408 = vmul.f32 %v400, %v407
        %v409 = vsub.f32 %v394, %v408
        %v410 = vmul.f32 %v409, %v409
        %v411 = vsel %vm397, %v410, 0.0
        %412 = vadd.xlane.f32.xlu0 %v411
        %v413 = vpop.xlane.xlu0 %412
        %v414 = vmul.f32 %v413, %v407
        %v415 = vadd.f32 %v414, 1e-12
        %v416 = vrsqrt.pop %v415
        %v417 = vmul.f32 %v416, %v415
        %v418 = vmul.f32 %v417, %v416
        %v419 = vmul.f32 0.5, %v418
        %v420 = vsub.f32 1.5, %v419
        %v421 = vmul.f32 %v416, %v420
        %vm422 = vweird.f32 %v415
        %vm423 = vweird.f32 %v416
        %vm424 = vmor %vm422, %vm423
        %v425 = vsel %vm424, %v416, %v421
        %v426 = vmul.f32 %v409, %v425
        %v428 = vperm.slane %v395, 0
        %v430 = vmul.f32 %v426, %v428
        %v432 = vperm.slane %v396, 0
        %v434 = vadd.f32 %v430, %v432
        %v435 = vpack.c.bf16 %v434, %v434
        %vm436 = vcmask 257024
        %437 = vst.msk [vmem:[%s343] sm:$0xf] %vm436, %v435
      $region56: #{tess_transformer_forward.12} parent=43 // pred_fallthru
        _
      %p438 = scmp.lt.s32.totalorder %s22, 1
      %s439 = scalar_select %p438, %s22, 1
      %p440 = scmp.lt.s32.totalorder %s23, 0
      %s441 = scalar_select %p440, %s23, 0
      %s442 = sadd.s32 %s441, %s439
      %s443 = smul.addr %s442, 4
      %s444 = scalar_lea.vmem %s6, %s443
      // Predicated region
      $region57: #{tess_transformer_forward.12} parent=43 // pred_check
        %p445 = pneg %p203
      $region58: #{tess_transformer_forward.12} parent=43 // pred_check_branch
        %447 = sbr.rel (%p445) target = $region60
      $region59: #{tess_transformer_forward.12} parent=43 // pred_region
        _
      $region60: #{tess_transformer_forward.12} parent=43 // pred_fallthru
        _
    $region44: #{tess_transformer_forward.12} parent=5 // pred_fallthru
      _
    %p448 = scmp.le.s32.totalorder 2, %s12
    // Predicated region
    $region61: #{tess_transformer_forward.12} parent=5 // pred_check
      %p449 = pneg %p448
    $region62: #{tess_transformer_forward.12} parent=5 // pred_check_branch
      %451 = sbr.rel (%p449) target = $region64
    $region63: #{tess_transformer_forward.12} parent=5 // pred_region
      %s452 = ssub.s32 %s12, 2
      // Predicated region
      $region65: #{tess_transformer_forward.12} parent=63 // pred_check
        %p453 = pneg %p209
      $region66: #{tess_transformer_forward.12} parent=63 // pred_check_branch
        %455 = sbr.rel (%p453) target = $region68
      $region67: #{tess_transformer_forward.12} parent=63 // pred_region
        %p456 = scmp.lt.s32.totalorder %s25, 1
        %s457 = scalar_select %p456, %s25, 1
        %p458 = scmp.lt.s32.totalorder %s26, 0
        %s459 = scalar_select %p458, %s26, 0
        %s460 = sadd.s32 %s459, %s457
        %s461 = smul.addr %s460, 4
        %s462 = scalar_lea.vmem %s6, %s461
      $region68: #{tess_transformer_forward.12} parent=63 // pred_fallthru
        _
    $region64: #{tess_transformer_forward.12} parent=5 // pred_fallthru
      _
  $region6: #{tess_transformer_forward.12} parent=0 // loop_footer
    %s16 = sadd.s32 1, %s12
  $region7: #{tess_transformer_forward.12} parent=0 // loop_footer_branch
    %11 = sbr.rel target = $region3
  $region8: #{tess_transformer_forward.12} parent=0 // loop_exit
    _

// kernel: tess_transformer_forward.13
$region0: #{tess_transformer_forward.13}
  #allocation0 [shape = 'u32[]', space=smem, size = 0x4, offset = 0x4, fixed_abs, tag = 'smem constant byte address 0x4 - core index']
  #allocation1 [shape = 'u32[72,128]{1,0:T(1,128)}', space=vmem, size = 0x9000, scoped, tag = 'internal scratch']
  #allocation2 [shape = 'f32[16,32]{1,0:T(8,128)}', space=vmem, size = 0x2000, scoped, tag = 'scratch operand']
  %s0 = inlined_call_operand.vmem [shape: bf16[16,32], index: 0, kind: input, shape index: {}]
  %s1 = inlined_call_operand.vmem [shape: bf16[32,64], index: 1, kind: input, shape index: {}]
  %s2 = inlined_call_operand.vmem [shape: f32[1,64], index: 2, kind: input, shape index: {}]
  %s3 = inlined_call_operand.vmem [shape: bf16[64,32], index: 3, kind: input, shape index: {}]
  %s4 = inlined_call_operand.vmem [shape: f32[1,32], index: 4, kind: input, shape index: {}]
  %s5 = inlined_call_operand.vmem [shape: f32[1,32], index: 5, kind: input, shape index: {}]
  %s6 = inlined_call_operand.vmem [shape: f32[1,32], index: 6, kind: input, shape index: {}]
  %s7 = inlined_call_operand.vmem [shape: bf16[16,32], index: 7, kind: output, shape index: {}]
  %s8 = sld [smem:[#allocation0]]
  $region50: #{tess_transformer_forward.13} parent=0
    _
  %s10 = ssub.s32 1, %s8
  %s11 = scalar_select 0, %s10, %s8
  // Predicated region
  $region2: #{tess_transformer_forward.13} parent=0 // pred_check
    _
  $region3: #{tess_transformer_forward.13} parent=0 // pred_check_branch
    %13 = sbr.rel (0) target = $region5
  $region4: #{tess_transformer_forward.13} parent=0 // pred_region
    _
  $region5: #{tess_transformer_forward.13} parent=0 // pred_fallthru
    _
  // Predicated region
  $region6: #{tess_transformer_forward.13} parent=0 // pred_check
    _
  $region7: #{tess_transformer_forward.13} parent=0 // pred_check_branch
    %15 = sbr.rel (0) target = $region9
  $region8: #{tess_transformer_forward.13} parent=0 // pred_region
    _
  $region9: #{tess_transformer_forward.13} parent=0 // pred_fallthru
    _
  // Predicated region
  $region10: #{tess_transformer_forward.13} parent=0 // pred_check
    _
  $region11: #{tess_transformer_forward.13} parent=0 // pred_check_branch
    %17 = sbr.rel (0) target = $region13
  $region12: #{tess_transformer_forward.13} parent=0 // pred_region
    _
  $region13: #{tess_transformer_forward.13} parent=0 // pred_fallthru
    _
  // Predicated region
  $region14: #{tess_transformer_forward.13} parent=0 // pred_check
    _
  $region15: #{tess_transformer_forward.13} parent=0 // pred_check_branch
    %19 = sbr.rel (0) target = $region17
  $region16: #{tess_transformer_forward.13} parent=0 // pred_region
    _
  $region17: #{tess_transformer_forward.13} parent=0 // pred_fallthru
    _
  // Predicated region
  $region18: #{tess_transformer_forward.13} parent=0 // pred_check
    _
  $region19: #{tess_transformer_forward.13} parent=0 // pred_check_branch
    %21 = sbr.rel (0) target = $region21
  $region20: #{tess_transformer_forward.13} parent=0 // pred_region
    _
  $region21: #{tess_transformer_forward.13} parent=0 // pred_fallthru
    _
  // Predicated region
  $region22: #{tess_transformer_forward.13} parent=0 // pred_check
    _
  $region23: #{tess_transformer_forward.13} parent=0 // pred_check_branch
    %23 = sbr.rel (0) target = $region25
  $region24: #{tess_transformer_forward.13} parent=0 // pred_region
    _
  $region25: #{tess_transformer_forward.13} parent=0 // pred_fallthru
    _
  // Predicated region
  $region26: #{tess_transformer_forward.13} parent=0 // pred_check
    _
  $region27: #{tess_transformer_forward.13} parent=0 // pred_check_branch
    %25 = sbr.rel (0) target = $region29
  $region28: #{tess_transformer_forward.13} parent=0 // pred_region
    _
  $region29: #{tess_transformer_forward.13} parent=0 // pred_fallthru
    _
  %v27 = vld [vmem:[%s0] sm:$0xf]
  %v28 = vld [vmem:[%s0 + $0x4] sm:$0xf]
  %v29 = vld [vmem:[%s1] sm:$0xf]
  %v30 = vld [vmem:[%s1 + $0x4] sm:$0xf]
  %v31 = vld [vmem:[%s1 + $0x8] sm:$0xf]
  %v32 = vld [vmem:[%s1 + $0xc] sm:$0xf]
  %v33 = vld [vmem:[%s2] sm:$0x1]
  %v35 = vperm.slane %v33, 0
  %v39 = vunpack.c.l.b16 %v27
  %v40 = vunpack.c.l.b16 %v28
  %v41 = vpack.c.b16 %v40, %v39
  %v46 = vunpack.c.l.b16 %v29
  %v47 = vunpack.c.l.b16 %v30
  %v48 = vunpack.c.l.b16 %v31
  %v49 = vunpack.c.l.b16 %v32
  %v50 = vpack.c.b16 %v47, %v46
  %v51 = vpack.c.b16 %v49, %v48
  %vm54 = vcmask 261120
  %v56 = vsel %vm54, %v41, 0
  %58 = vmatpush.bf16.msra.mxu0 0
  %59 = vmatpush.bf16.msra.mxu0 0
  %60 = vmatpush.bf16.msra.mxu0 0
  %61 = vmatpush.bf16.msra.mxu0 0
  %62 = vmatpush.bf16.msra.mxu0 0
  %63 = vmatpush.bf16.msra.mxu0 0
  %64 = vmatpush.bf16.msra.mxu0 %v51
  %65 = vmatpush.bf16.msra.mxu0 %v50
  %66 = vmatmul.bf16.gmra.mxu0 %v56
  %v67 = vpop.f32.mrf.mxu0
  %v68 = vadd.f32 %v35, %v67
  %v69 = vpop.f32.mrf.mxu0
  %v70 = vadd.f32 %v35, %v69
  %71 = vdwg.mxu0
  %v72 = vmul.f32 %v68, 0.5
  %v73 = vmul.f32 %v70, 0.5
  %v74 = vmul.f32 %v68, 0.044715
  %v75 = vmul.f32 %v70, 0.044715
  %v76 = vmul.f32 %v74, %v68
  %v77 = vmul.f32 %v75, %v70
  %v78 = vmul.f32 %v76, %v68
  %v79 = vmul.f32 %v77, %v70
  %v80 = vadd.f32 %v68, %v78
  %v81 = vadd.f32 %v70, %v79
  %v82 = vmul.f32 %v80, 0.7978846
  %v83 = vmul.f32 %v81, 0.7978846
  %v84 = vtanh.pop %v82
  %v85 = vtanh.pop %v83
  %v86 = vadd.f32 %v84, 1.0
  %v87 = vadd.f32 %v85, 1.0
  %v88 = vmul.f32 %v72, %v86
  %v89 = vmul.f32 %v73, %v87
  %v90 = vpack.c.bf16 %v89, %v88
  %v91 = vld [vmem:[%s3] sm:$0xf]
  %v92 = vld [vmem:[%s3 + $0x4] sm:$0xf]
  %v93 = vld [vmem:[%s3 + $0x8] sm:$0xf]
  %v94 = vld [vmem:[%s3 + $0xc] sm:$0xf]
  %v95 = vld [vmem:[%s3 + $0x10] sm:$0xf]
  %v96 = vld [vmem:[%s3 + $0x14] sm:$0xf]
  %v97 = vld [vmem:[%s3 + $0x18] sm:$0xf]
  %v98 = vld [vmem:[%s3 + $0x1c] sm:$0xf]
  %v107 = vunpack.c.l.b16 %v91
  %v108 = vunpack.c.l.b16 %v92
  %v109 = vunpack.c.l.b16 %v93
  %v110 = vunpack.c.l.b16 %v94
  %v111 = vunpack.c.l.b16 %v95
  %v112 = vunpack.c.l.b16 %v96
  %v113 = vunpack.c.l.b16 %v97
  %v114 = vunpack.c.l.b16 %v98
  %v115 = vpack.c.b16 %v108, %v107
  %v116 = vpack.c.b16 %v110, %v109
  %v117 = vpack.c.b16 %v112, %v111
  %v118 = vpack.c.b16 %v114, %v113
  %vm123 = vcmask 523264
  %v125 = vsel %vm123, %v90, 0
  %127 = vmatpush.bf16.msra.mxu0 0
  %128 = vmatpush.bf16.msra.mxu0 0
  %129 = vmatpush.bf16.msra.mxu0 0
  %130 = vmatpush.bf16.msra.mxu0 0
  %131 = vmatpush.bf16.msra.mxu0 %v118
  %132 = vmatpush.bf16.msra.mxu0 %v117
  %133 = vmatpush.bf16.msra.mxu0 %v116
  %134 = vmatpush.bf16.msra.mxu0 %v115
  %135 = vmatmul.bf16.gmra.mxu0 %v125
  %v136 = vpop.f32.mrf.mxu0
  %v137 = vadd.f32 0.0, %v136
  %v138 = vpop.f32.mrf.mxu0
  %v139 = vadd.f32 0.0, %v138
  %140 = vdwg.mxu0
  %p141 = scmp.eq.s32.totalorder 0, 0
  // Predicated region
  $region30: #{tess_transformer_forward.13} parent=0 // pred_check
    %p142 = pneg %p141
  $region31: #{tess_transformer_forward.13} parent=0 // pred_check_branch
    %144 = sbr.rel (%p142) target = $region33
  $region32: #{tess_transformer_forward.13} parent=0 // pred_region
    %145 = vst.msk [vmem:[#allocation2] sm:$0xff] %vm54, %v137
    %146 = vst.msk [vmem:[#allocation2 + $0x8] sm:$0xff] %vm54, %v139
  $region33: #{tess_transformer_forward.13} parent=0 // pred_fallthru
    _
  %p147 = scmp.gt.s32.totalorder 0, 0
  // Predicated region
  $region34: #{tess_transformer_forward.13} parent=0 // pred_check
    %p148 = pneg %p147
  $region35: #{tess_transformer_forward.13} parent=0 // pred_check_branch
    %150 = sbr.rel (%p148) target = $region37
  $region36: #{tess_transformer_forward.13} parent=0 // pred_region
    %v151 = vld [vmem:[#allocation2] sm:$0xff]
    %v152 = vld [vmem:[#allocation2 + $0x8] sm:$0xff]
    %v153 = vadd.f32 %v151, %v137
    %v154 = vadd.f32 %v152, %v139
    %155 = vst.msk [vmem:[#allocation2] sm:$0xff] %vm54, %v153
    %156 = vst.msk [vmem:[#allocation2 + $0x8] sm:$0xff] %vm54, %v154
  $region37: #{tess_transformer_forward.13} parent=0 // pred_fallthru
    _
  // Predicated region
  $region38: #{tess_transformer_forward.13} parent=0 // pred_check
    %p157 = pneg %p141
  $region39: #{tess_transformer_forward.13} parent=0 // pred_check_branch
    %159 = sbr.rel (%p157) target = $region41
  $region40: #{tess_transformer_forward.13} parent=0 // pred_region
    %v160 = vld [vmem:[#allocation2] sm:$0xff]
    %v161 = vld [vmem:[#allocation2 + $0x8] sm:$0xff]
    %v162 = vld [vmem:[%s4] sm:$0x1]
    %v164 = vperm.slane %v162, 0
    %v166 = vadd.f32 %v160, %v164
    %v167 = vadd.f32 %v161, %v164
    %v168 = vunpack.c.l.bf16 %v27
    %v169 = vunpack.c.l.bf16 %v28
    %v170 = vadd.f32 %v166, %v168
    %v171 = vadd.f32 %v167, %v169
    %v172 = vld [vmem:[%s5] sm:$0x1]
    %v173 = vld [vmem:[%s6] sm:$0x1]
    %v174 = vsel %vm54, %v170, 0.0
    %175 = vadd.xlane.f32.xlu0 %v174
    %v176 = vpop.xlane.xlu0 %175
    %v177 = vsel %vm54, %v171, 0.0
    %178 = vadd.xlane.f32.xlu0 %v177
    %v179 = vpop.xlane.xlu0 %178
    %v180 = vrcp.pop 32.0
    %v181 = vmul.f32 32.0, %v180
    %v182 = vsub.f32 1.0, %v181
    %v183 = vmul.f32 %v180, %v182
    %v184 = vadd.f32 %v180, %v183
    %vm185 = vweird.f32 %v180
    %v186 = vsel %vm185, %v180, %v184
    %v187 = vmul.f32 %v176, %v186
    %v188 = vmul.f32 %v179, %v186
    %v189 = vsub.f32 %v170, %v187
    %v190 = vsub.f32 %v171, %v188
    %v191 = vmul.f32 %v189, %v189
    %v192 = vmul.f32 %v190, %v190
    %v193 = vsel %vm54, %v191, 0.0
    %194 = vadd.xlane.f32.xlu0 %v193
    %v195 = vpop.xlane.xlu0 %194
    %v196 = vsel %vm54, %v192, 0.0
    %197 = vadd.xlane.f32.xlu0 %v196
    %v198 = vpop.xlane.xlu0 %197
    %v199 = vmul.f32 %v195, %v186
    %v200 = vmul.f32 %v198, %v186
    %v201 = vadd.f32 %v199, 1e-12
    %v202 = vadd.f32 %v200, 1e-12
    %v203 = vrsqrt.pop %v201
    %v204 = vmul.f32 %v203, %v201
    %v205 = vmul.f32 %v204, %v203
    %v206 = vmul.f32 0.5, %v205
    %v207 = vsub.f32 1.5, %v206
    %v208 = vmul.f32 %v203, %v207
    %vm209 = vweird.f32 %v201
    %vm210 = vweird.f32 %v203
    %vm211 = vmor %vm209, %vm210
    %v212 = vsel %vm211, %v203, %v208
    %v213 = vrsqrt.pop %v202
    %v214 = vmul.f32 %v213, %v202
    %v215 = vmul.f32 %v214, %v213
    %v216 = vmul.f32 0.5, %v215
    %v217 = vsub.f32 1.5, %v216
    %v218 = vmul.f32 %v213, %v217
    %vm219 = vweird.f32 %v202
    %vm220 = vweird.f32 %v213
    %vm221 = vmor %vm219, %vm220
    %v222 = vsel %vm221, %v213, %v218
    %v223 = vmul.f32 %v189, %v212
    %v224 = vmul.f32 %v190, %v222
    %v226 = vperm.slane %v172, 0
    %v228 = vmul.f32 %v223, %v226
    %v229 = vmul.f32 %v224, %v226
    %v231 = vperm.slane %v173, 0
    %v233 = vadd.f32 %v228, %v231
    %v234 = vadd.f32 %v229, %v231
    %v235 = vpack.c.bf16 %v233, %v233
    %v236 = vpack.c.bf16 %v234, %v234
    %vm237 = vcmask 257024
    %238 = vst.msk [vmem:[%s7] sm:$0xf] %vm237, %v235
    %239 = vst.msk [vmem:[%s7 + $0x4] sm:$0xf] %vm237, %v236
  $region41: #{tess_transformer_forward.13} parent=0 // pred_fallthru
    _
  // Predicated region
  $region42: #{tess_transformer_forward.13} parent=0 // pred_check
    _
  $region43: #{tess_transformer_forward.13} parent=0 // pred_check_branch
    %241 = sbr.rel (0) target = $region45
  $region44: #{tess_transformer_forward.13} parent=0 // pred_region
    _
  $region45: #{tess_transformer_forward.13} parent=0 // pred_fallthru
    _
  // Predicated region
  $region46: #{tess_transformer_forward.13} parent=0 // pred_check
    _
  $region47: #{tess_transformer_forward.13} parent=0 // pred_check_branch
    %243 = sbr.rel (0) target = $region49
  $region48: #{tess_transformer_forward.13} parent=0 // pred_region
    _
  $region49: #{tess_transformer_forward.13} parent=0 // pred_fallthru
    _

</llo_original>
